<compile_context>
chip_gen: v7x
topology: tpu7x:2x2x1
jax: 0.10.0
libtpu: 0.0.40
codegen_flags: <defaults>
</compile_context>

<pallas_src>
import functools
import math

import jax
import jax.numpy as jnp
from jax import lax
from jax.experimental import pallas as pl
from jax.experimental.pallas import tpu as pltpu


def _device_kind() -> str:
    try:
        return jax.local_devices()[0].device_kind.lower()
    except Exception:
        return ""


_KIND = _device_kind()
# v5e/v5p/v6e have 128 MiB VMEM per TensorCore; v7x only 64 MiB -> stay conservative.
_BIG_VMEM = ("v5" in _KIND) or ("v6" in _KIND)
# v6e/v7x EUPs have a bf16 transcendental path; v5e/v4 do not.
_BF16_EUP = ("v6" in _KIND) or ("v7" in _KIND) or ("7x" in _KIND)

_VMEM_LIMIT = (100 if _BIG_VMEM else 48) * 1024 * 1024
_ATTN_TILE_TARGET = 512 if _BIG_VMEM else 256
_PROJ_TILE_TARGET = 256


def _pick_tile(n, target):
    """Largest multiple-of-8 divisor of n that is <= target (or n itself)."""
    if n <= target:
        return n
    for t in range(target, 7, -8):
        if n % t == 0:
            return t
    return n


# ---------------------------------------------------------------------------
# Kernel 1: fused QKV projection (q pre-scaled by 1/sqrt(head_dim)).
# ---------------------------------------------------------------------------
def _qkv_proj_kernel(x_ref, w_ref, b_ref, q_ref, k_ref, v_ref, *, n_embd, scale):
    x = x_ref[0].astype(jnp.bfloat16)                                   # (tr, C)
    qkv = jnp.dot(x, w_ref[...],
                  preferred_element_type=jnp.float32) + b_ref[...]      # (tr, 3C) f32
    C = n_embd
    q_ref[0] = (qkv[:, 0:C] * scale).astype(q_ref.dtype)   # fold 1/sqrt(D) into q
    k_ref[0] = qkv[:, C:2 * C].astype(k_ref.dtype)
    v_ref[0] = qkv[:, 2 * C:3 * C].astype(v_ref.dtype)


def _qkv_projection(x, wqkv_bf16, bqkv, n_head):
    B, T, C = x.shape
    D = C // n_head
    tr = _pick_tile(T, _PROJ_TILE_TARGET)
    kernel = functools.partial(_qkv_proj_kernel, n_embd=C,
                               scale=1.0 / math.sqrt(D))
    sds = jax.ShapeDtypeStruct((B, T, C), jnp.bfloat16)
    row_spec = pl.BlockSpec((1, tr, C), lambda b, r: (b, r, 0))
    # TODO(synk): single-buffer the constant-index Wqkv/bqkv blocks
    # (pipeline_mode=pl.Buffered(1)) and tile the 3C output dim for very
    # large C on v7x; kept default-buffered here for lowering safety.
    return pl.pallas_call(
        kernel,
        out_shape=[sds, sds, sds],
        grid_spec=pltpu.PrefetchScalarGridSpec(
            num_scalar_prefetch=0,
            grid=(B, T // tr),
            in_specs=[
                row_spec,                                        # x tile
                pl.BlockSpec((C, 3 * C), lambda b, r: (0, 0)),   # Wqkv (bf16)
                pl.BlockSpec((1, 3 * C), lambda b, r: (0, 0)),   # bqkv (f32)
            ],
            out_specs=[row_spec, row_spec, row_spec],
        ),
        compiler_params=pltpu.CompilerParams(
            dimension_semantics=("parallel", "parallel"),
            vmem_limit_bytes=_VMEM_LIMIT),
    )(x, wqkv_bf16, bqkv)


# ---------------------------------------------------------------------------
# Kernel 2: flash attention (flattened causal lower-triangle grid) fused with
#           the output projection on the diagonal (finalize) step.
# ---------------------------------------------------------------------------
def _flash_attn_proj_kernel(qid_ref, kvid_ref, q_ref, k_ref, v_ref, wp_ref,
                            bp_ref, o_ref, m_ref, l_ref, acc_ref, *,
                            n_head, head_dim, use_bf16_exp):
    step = pl.program_id(1)
    q_i = qid_ref[step]           # q-tile index of this lower-triangle step
    kv_i = kvid_ref[step]         # kv-tile index (kv_i <= q_i by construction)

    H, D = n_head, head_dim
    tq = q_ref.shape[1]
    tk = k_ref.shape[1]

    @pl.when(kv_i == 0)
    def _init():
        m_ref[...] = jnp.full(m_ref.shape, -1e30, m_ref.dtype)
        l_ref[...] = jnp.zeros(l_ref.shape, l_ref.dtype)
        acc_ref[...] = jnp.zeros(acc_ref.shape, acc_ref.dtype)

    q_full = q_ref[0]             # (tq, C) bf16, pre-scaled by 1/sqrt(D)
    k_full = k_ref[0]             # (tk, C) bf16
    v_full = v_ref[0]             # (tk, C) bf16

    # Causal mask bias: only the diagonal tile needs masking (tq == tk, aligned
    # tiles). One 2-D (tq, tk) iota is shared across all heads.
    # NOTE: -1e30 + f32 running max is safe for causal attention because the
    # diagonal tile always has unmasked entries; do NOT reuse this kernel for
    # padding masks with fully-masked rows.
    row = lax.broadcasted_iota(jnp.int32, (tq, tk), 0)
    col = lax.broadcasted_iota(jnp.int32, (tq, tk), 1)
    on_diag = kv_i == q_i
    mask_bias = jnp.where(jnp.logical_and(on_diag, row < col),
                          jnp.float32(-1e30), jnp.float32(0.0))

    for h in range(H):            # static unroll; per-head temporaries are (tq, tk)
        sl = slice(h * D, (h + 1) * D)
        q_h = q_full[:, sl]                                       # (tq, D) bf16
        k_h = k_full[:, sl]                                       # (tk, D) bf16
        v_h = v_full[:, sl]                                       # (tk, D) bf16

        s = lax.dot_general(q_h, k_h, (((1,), (1,)), ((), ())),
                            preferred_element_type=jnp.float32)   # (tq, tk) f32
        s = s + mask_bias

        m_prev = m_ref[h]                                         # (tq, 1) f32
        m_new = jnp.maximum(m_prev, jnp.max(s, axis=-1, keepdims=True))
        alpha = jnp.exp(m_prev - m_new)                           # (tq, 1) f32

        if use_bf16_exp:
            # v6e/v7x: EUP bf16 path -> ~2x transcendental throughput; the
            # running-sum / accumulator state stays f32.
            p = jnp.exp((s - m_new).astype(jnp.bfloat16))         # (tq, tk) bf16
            p_sum = jnp.sum(p.astype(jnp.float32), axis=-1, keepdims=True)
        else:
            p_f32 = jnp.exp(s - m_new)                            # (tq, tk) f32
            p = p_f32.astype(jnp.bfloat16)
            p_sum = jnp.sum(p_f32, axis=-1, keepdims=True)

        l_ref[h] = alpha * l_ref[h] + p_sum
        acc_ref[h] = alpha * acc_ref[h] + jnp.dot(
            p, v_h, preferred_element_type=jnp.float32)           # (tq, D) f32
        m_ref[h] = m_new

    @pl.when(on_diag)             # last kv step for this q tile: normalize + c_proj
    def _finalize():
        out = None
        for h in range(H):
            # approx reciprocal: ~1e-3 relative error; fine for bf16/f32 output.
            inv_l = pl.reciprocal(l_ref[h], approx=True)          # (tq, 1)
            y_h = (acc_ref[h] * inv_l).astype(jnp.bfloat16)       # (tq, D)
            w_h = wp_ref[h * D:(h + 1) * D, :]                    # (D, C) bf16
            part = jnp.dot(y_h, w_h, preferred_element_type=jnp.float32)
            out = part if out is None else out + part
        o_ref[0] = (out + bp_ref[...]).astype(o_ref.dtype)        # (tq, C)


def _flash_attention_proj(q, k, v, wproj_bf16, bproj, out_dtype, n_head):
    B, T, C = q.shape
    D = C // n_head
    tq = _pick_tile(T, _ATTN_TILE_TARGET)
    tk = tq
    nq = T // tq

    # Flattened lower-triangle (q_tile, kv_tile) schedule: every grid step does
    # useful work, and skipped (above-diagonal) tiles never exist -> no wasted
    # per-step overhead and no extra DMA.
    q_ids, kv_ids = [], []
    for qi in range(nq):
        for ki in range(qi + 1):
            q_ids.append(qi)
            kv_ids.append(ki)
    n_steps = len(q_ids)
    q_ids = jnp.asarray(q_ids, dtype=jnp.int32)
    kv_ids = jnp.asarray(kv_ids, dtype=jnp.int32)

    def q_map(b, s, q_ids_ref, kv_ids_ref):
        return (b, q_ids_ref[s], 0)

    def kv_map(b, s, q_ids_ref, kv_ids_ref):
        return (b, kv_ids_ref[s], 0)

    def const_map(b, s, q_ids_ref, kv_ids_ref):
        return (0, 0)

    kernel = functools.partial(_flash_attn_proj_kernel, n_head=n_head,
                               head_dim=D, use_bf16_exp=_BF16_EUP)

    return pl.pallas_call(
        kernel,
        out_shape=jax.ShapeDtypeStruct((B, T, C), out_dtype),
        grid_spec=pltpu.PrefetchScalarGridSpec(
            num_scalar_prefetch=2,
            grid=(B, n_steps),
            in_specs=[
                pl.BlockSpec((1, tq, C), q_map),     # q rows (lane-dense, full C)
                pl.BlockSpec((1, tk, C), kv_map),    # k rows
                pl.BlockSpec((1, tk, C), kv_map),    # v rows
                pl.BlockSpec((C, C), const_map),     # Wproj (bf16, resident)
                pl.BlockSpec((1, C), const_map),     # bproj (f32)
            ],
            out_specs=pl.BlockSpec((1, tq, C), q_map),
            scratch_shapes=[
                pltpu.VMEM((n_head, tq, 1), jnp.float32),   # running max  m
                pltpu.VMEM((n_head, tq, 1), jnp.float32),   # running sum  l
                pltpu.VMEM((n_head, tq, D), jnp.float32),   # output accumulator
            ],
        ),
        compiler_params=pltpu.CompilerParams(
            dimension_semantics=("parallel", "arbitrary"),
            vmem_limit_bytes=_VMEM_LIMIT),
    )(q_ids, kv_ids, q, k, v, wproj_bf16, bproj)


# ---------------------------------------------------------------------------
# Public entry point.
# ---------------------------------------------------------------------------
@functools.partial(jax.jit, static_argnames=("n_head",))
def causal_self_attention(x, wqkv, bqkv, wproj, bproj, n_head):
    """x: (B, T, C); wqkv: (C, 3C); bqkv: (1, 3C); wproj: (C, C); bproj: (1, C)."""
    q, k, v = _qkv_projection(x, wqkv.astype(jnp.bfloat16),
                              bqkv.astype(jnp.float32), n_head)
    # Heads are split/merged inside the attention kernel (per-head lane slices),
    # so q/k/v stay in (B, T, C) layout and there are no XLA transpose passes
    # over HBM; the output projection is fused into the attention finalize.
    return _flash_attention_proj(q, k, v, wproj.astype(jnp.bfloat16),
                                 bproj.astype(jnp.float32), x.dtype, n_head)


# ---------------------------------------------------------------------------
# Pure-JAX reference (f32) and self-test.
# ---------------------------------------------------------------------------
def _reference(x, wqkv, bqkv, wproj, bproj, n_head):
    B, T, C = x.shape
    D = C // n_head
    qkv = x @ wqkv + bqkv[0]
    q, k, v = jnp.split(qkv, 3, axis=2)
    q = q.reshape(B, T, n_head, D).transpose(0, 2, 1, 3)
    k = k.reshape(B, T, n_head, D).transpose(0, 2, 1, 3)
    v = v.reshape(B, T, n_head, D).transpose(0, 2, 1, 3)
    att = (q @ jnp.swapaxes(k, -2, -1)) * (1.0 / math.sqrt(D))
    mask = jnp.tril(jnp.ones((T, T), dtype=bool))
    att = jnp.where(mask[None, None], att, -jnp.inf)
    att = jax.nn.softmax(att, axis=-1)
    y = att @ v
    y = y.transpose(0, 2, 1, 3).reshape(B, T, C)
    return y @ wproj + bproj[0]


if __name__ == "__main__":
    # Small config consistent with the module: B=2, T=8, n_embd=32, n_head=4.
    B, T, C, n_head = 2, 8, 32, 4

    key = jax.random.PRNGKey(0)
    kx, k1, k2, k3, k4 = jax.random.split(key, 5)

    x = jax.random.normal(kx, (B, T, C), dtype=jnp.float32)
    wqkv = 0.02 * jax.random.normal(k1, (C, 3 * C), dtype=jnp.float32)
    bqkv = 0.02 * jax.random.normal(k2, (1, 3 * C), dtype=jnp.float32)
    wproj = 0.02 * jax.random.normal(k3, (C, C), dtype=jnp.float32)
    bproj = 0.02 * jax.random.normal(k4, (1, C), dtype=jnp.float32)

    out = causal_self_attention(x, wqkv, bqkv, wproj, bproj, n_head=n_head)
    out = jax.block_until_ready(out)

    ref = _reference(x, wqkv, bqkv, wproj, bproj, n_head)
    assert out.shape == (B, T, C)
    err = float(jnp.max(jnp.abs(out - ref)))
    assert err < 1e-2, f"mismatch vs. pure-JAX reference: {err}"

    print("KERNEL_OK")
</pallas_src>

<mosaic_0001>
module attributes {stable_mosaic.version = 11 : i64} {
  func.func @_qkv_proj_kernel(%arg0: i32, %arg1: i32, %arg2: memref<1x8x32xf32, #tpu.memory_space<vmem>>, %arg3: memref<32x96xbf16, #tpu.memory_space<vmem>>, %arg4: memref<1x96xf32, #tpu.memory_space<vmem>>, %arg5: memref<1x8x32xbf16, #tpu.memory_space<vmem>>, %arg6: memref<1x8x32xbf16, #tpu.memory_space<vmem>>, %arg7: memref<1x8x32xbf16, #tpu.memory_space<vmem>>) attributes {dimension_semantics = [#tpu.dimension_semantics<parallel>, #tpu.dimension_semantics<parallel>], iteration_bounds = array<i64: 2, 1>, scalar_prefetch = 0 : i64, scratch_operands = 0 : i64, tpu.core_type = #tpu.core_type<tc>, window_params = [{transform_indices = @transform_0, window_bounds = array<i64: 1, 8, 32>}, {pipeline_mode = #tpu.pipeline_mode<synchronous>, transform_indices = @transform_1, window_bounds = array<i64: 32, 96>}, {pipeline_mode = #tpu.pipeline_mode<synchronous>, transform_indices = @transform_2, window_bounds = array<i64: 1, 96>}, {transform_indices = @transform_3, window_bounds = array<i64: 1, 8, 32>}, {transform_indices = @transform_4, window_bounds = array<i64: 1, 8, 32>}, {transform_indices = @transform_5, window_bounds = array<i64: 1, 8, 32>}]} {
    %c0 = arith.constant 0 : index
    %c0_0 = arith.constant 0 : index
    %c0_1 = arith.constant 0 : index
    %0 = vector.load %arg2[%c0, %c0_0, %c0_1] : memref<1x8x32xf32, #tpu.memory_space<vmem>>, vector<1x8x32xf32>
    %1 = vector.shape_cast %0 : vector<1x8x32xf32> to vector<8x32xf32>
    %2 = arith.truncf %1 : vector<8x32xf32> to vector<8x32xbf16>
    %c0_2 = arith.constant 0 : index
    %c0_3 = arith.constant 0 : index
    %3 = vector.load %arg3[%c0_2, %c0_3] : memref<32x96xbf16, #tpu.memory_space<vmem>>, vector<32x96xbf16>
    %cst = arith.constant dense<0.000000e+00> : vector<8x96xf32>
    %4 = tpu.matmul %2, %3, %cst {dimension_numbers = #tpu.dot_dimension_numbers<[1], [0], [0], [1], [0, 0, 1, 1], [], []>} : vector<8x32xbf16>, vector<32x96xbf16>, vector<8x96xf32> -> vector<8x96xf32>
    %c0_4 = arith.constant 0 : index
    %c0_5 = arith.constant 0 : index
    %5 = vector.load %arg4[%c0_4, %c0_5] : memref<1x96xf32, #tpu.memory_space<vmem>>, vector<1x96xf32>
    %6 = vector.broadcast %5 : vector<1x96xf32> to vector<8x96xf32>
    %7 = arith.addf %4, %6 : vector<8x96xf32>
    %8 = vector.extract_strided_slice %7 {offsets = [0, 0], sizes = [8, 32], strides = [1, 1]} : vector<8x96xf32> to vector<8x32xf32>
    %cst_6 = arith.constant 0.353553385 : f32
    %9 = vector.broadcast %cst_6 : f32 to vector<8x32xf32>
    %10 = arith.mulf %8, %9 : vector<8x32xf32>
    %11 = arith.truncf %10 : vector<8x32xf32> to vector<8x32xbf16>
    %c0_7 = arith.constant 0 : index
    %c0_8 = arith.constant 0 : index
    %c0_9 = arith.constant 0 : index
    %12 = vector.load %arg5[%c0_7, %c0_8, %c0_9] : memref<1x8x32xbf16, #tpu.memory_space<vmem>>, vector<1x8x32xbf16>
    %13 = vector.shape_cast %12 : vector<1x8x32xbf16> to vector<8x32xbf16>
    %14 = vector.shape_cast %11 : vector<8x32xbf16> to vector<1x8x32xbf16>
    tpu.vector_store %arg5[%c0_7, %c0_8, %c0_9], %14 {strides = array<i32>} : memref<1x8x32xbf16, #tpu.memory_space<vmem>>, vector<1x8x32xbf16>,
    %15 = vector.extract_strided_slice %7 {offsets = [0, 32], sizes = [8, 32], strides = [1, 1]} : vector<8x96xf32> to vector<8x32xf32>
    %16 = arith.truncf %15 : vector<8x32xf32> to vector<8x32xbf16>
    %c0_10 = arith.constant 0 : index
    %c0_11 = arith.constant 0 : index
    %c0_12 = arith.constant 0 : index
    %17 = vector.load %arg6[%c0_10, %c0_11, %c0_12] : memref<1x8x32xbf16, #tpu.memory_space<vmem>>, vector<1x8x32xbf16>
    %18 = vector.shape_cast %17 : vector<1x8x32xbf16> to vector<8x32xbf16>
    %19 = vector.shape_cast %16 : vector<8x32xbf16> to vector<1x8x32xbf16>
    tpu.vector_store %arg6[%c0_10, %c0_11, %c0_12], %19 {strides = array<i32>} : memref<1x8x32xbf16, #tpu.memory_space<vmem>>, vector<1x8x32xbf16>,
    %20 = vector.extract_strided_slice %7 {offsets = [0, 64], sizes = [8, 32], strides = [1, 1]} : vector<8x96xf32> to vector<8x32xf32>
    %21 = arith.truncf %20 : vector<8x32xf32> to vector<8x32xbf16>
    %c0_13 = arith.constant 0 : index
    %c0_14 = arith.constant 0 : index
    %c0_15 = arith.constant 0 : index
    %22 = vector.load %arg7[%c0_13, %c0_14, %c0_15] : memref<1x8x32xbf16, #tpu.memory_space<vmem>>, vector<1x8x32xbf16>
    %23 = vector.shape_cast %22 : vector<1x8x32xbf16> to vector<8x32xbf16>
    %24 = vector.shape_cast %21 : vector<8x32xbf16> to vector<1x8x32xbf16>
    tpu.vector_store %arg7[%c0_13, %c0_14, %c0_15], %24 {strides = array<i32>} : memref<1x8x32xbf16, #tpu.memory_space<vmem>>, vector<1x8x32xbf16>,
    return
  }
  func.func @transform_0(%arg0: i32, %arg1: i32) -> (i32, i32, i32) {
    %c0_i32 = arith.constant 0 : i32
    %c0_i32_0 = arith.constant 0 : i32
    return %arg0, %arg1, %c0_i32 : i32, i32, i32
  }
  func.func @transform_1(%arg0: i32, %arg1: i32) -> (i32, i32) {
    %c0_i32 = arith.constant 0 : i32
    %c0_i32_0 = arith.constant 0 : i32
    %c0_i32_1 = arith.constant 0 : i32
    return %c0_i32, %c0_i32_0 : i32, i32
  }
  func.func @transform_2(%arg0: i32, %arg1: i32) -> (i32, i32) {
    %c0_i32 = arith.constant 0 : i32
    %c0_i32_0 = arith.constant 0 : i32
    %c0_i32_1 = arith.constant 0 : i32
    return %c0_i32, %c0_i32_0 : i32, i32
  }
  func.func @transform_3(%arg0: i32, %arg1: i32) -> (i32, i32, i32) {
    %c0_i32 = arith.constant 0 : i32
    %c0_i32_0 = arith.constant 0 : i32
    return %arg0, %arg1, %c0_i32 : i32, i32, i32
  }
  func.func @transform_4(%arg0: i32, %arg1: i32) -> (i32, i32, i32) {
    %c0_i32 = arith.constant 0 : i32
    %c0_i32_0 = arith.constant 0 : i32
    return %arg0, %arg1, %c0_i32 : i32, i32, i32
  }
  func.func @transform_5(%arg0: i32, %arg1: i32) -> (i32, i32, i32) {
    %c0_i32 = arith.constant 0 : i32
    %c0_i32_0 = arith.constant 0 : i32
    return %arg0, %arg1, %c0_i32 : i32, i32, i32
  }
}

module attributes {stable_mosaic.version = 11 : i64} {
  func.func @_flash_attn_proj_kernel(%arg0: i32, %arg1: i32, %arg2: memref<1xi32, #tpu.memory_space<smem>>, %arg3: memref<1xi32, #tpu.memory_space<smem>>, %arg4: memref<1x8x32xbf16, #tpu.memory_space<vmem>>, %arg5: memref<1x8x32xbf16, #tpu.memory_space<vmem>>, %arg6: memref<1x8x32xbf16, #tpu.memory_space<vmem>>, %arg7: memref<32x32xbf16, #tpu.memory_space<vmem>>, %arg8: memref<1x32xf32, #tpu.memory_space<vmem>>, %arg9: memref<1x8x32xf32, #tpu.memory_space<vmem>>, %arg10: memref<4x8x1xf32, #tpu.memory_space<vmem>>, %arg11: memref<4x8x1xf32, #tpu.memory_space<vmem>>, %arg12: memref<4x8x8xf32, #tpu.memory_space<vmem>>) attributes {dimension_semantics = [#tpu.dimension_semantics<parallel>, #tpu.dimension_semantics<arbitrary>], iteration_bounds = array<i64: 2, 1>, scalar_prefetch = 2 : i64, scratch_operands = 3 : i64, tpu.core_type = #tpu.core_type<tc>, window_params = [{transform_indices = @transform_0, window_bounds = array<i64: 1, 8, 32>}, {transform_indices = @transform_1, window_bounds = array<i64: 1, 8, 32>}, {transform_indices = @transform_2, window_bounds = array<i64: 1, 8, 32>}, {pipeline_mode = #tpu.pipeline_mode<synchronous>, transform_indices = @transform_3, window_bounds = array<i64: 32, 32>}, {pipeline_mode = #tpu.pipeline_mode<synchronous>, transform_indices = @transform_4, window_bounds = array<i64: 1, 32>}, {transform_indices = @transform_5, window_bounds = array<i64: 1, 8, 32>}]} {
    %0 = arith.index_cast %arg1 : i32 to index
    %1 = memref.load %arg2[%0] : memref<1xi32, #tpu.memory_space<smem>>
    %2 = arith.index_cast %arg1 : i32 to index
    %3 = memref.load %arg3[%2] : memref<1xi32, #tpu.memory_space<smem>>
    %c0_i32 = arith.constant 0 : i32
    %4 = arith.cmpi eq, %3, %c0_i32 : i32
    %5 = arith.extui %4 : i1 to i32
    %c0_i32_0 = arith.constant 0 : i32
    %6 = arith.cmpi ne, %5, %c0_i32_0 : i32
    scf.if %6 {
      %cst_96 = arith.constant -1.000000e+30 : f32
      %172 = vector.broadcast %cst_96 : f32 to vector<4x8x1xf32>
      %c0_97 = arith.constant 0 : index
      %c0_98 = arith.constant 0 : index
      %c0_99 = arith.constant 0 : index
      %173 = vector.load %arg10[%c0_97, %c0_98, %c0_99] : memref<4x8x1xf32, #tpu.memory_space<vmem>>, vector<4x8x1xf32>
      tpu.vector_store %arg10[%c0_97, %c0_98, %c0_99], %172 {strides = array<i32>} : memref<4x8x1xf32, #tpu.memory_space<vmem>>, vector<4x8x1xf32>,
      %cst_100 = arith.constant 0.000000e+00 : f32
      %174 = vector.broadcast %cst_100 : f32 to vector<4x8x1xf32>
      %c0_101 = arith.constant 0 : index
      %c0_102 = arith.constant 0 : index
      %c0_103 = arith.constant 0 : index
      %175 = vector.load %arg11[%c0_101, %c0_102, %c0_103] : memref<4x8x1xf32, #tpu.memory_space<vmem>>, vector<4x8x1xf32>
      tpu.vector_store %arg11[%c0_101, %c0_102, %c0_103], %174 {strides = array<i32>} : memref<4x8x1xf32, #tpu.memory_space<vmem>>, vector<4x8x1xf32>,
      %cst_104 = arith.constant 0.000000e+00 : f32
      %176 = vector.broadcast %cst_104 : f32 to vector<4x8x8xf32>
      %c0_105 = arith.constant 0 : index
      %c0_106 = arith.constant 0 : index
      %c0_107 = arith.constant 0 : index
      %177 = vector.load %arg12[%c0_105, %c0_106, %c0_107] : memref<4x8x8xf32, #tpu.memory_space<vmem>>, vector<4x8x8xf32>
      tpu.vector_store %arg12[%c0_105, %c0_106, %c0_107], %176 {strides = array<i32>} : memref<4x8x8xf32, #tpu.memory_space<vmem>>, vector<4x8x8xf32>,
    } else {
    }
    %c0 = arith.constant 0 : index
    %c0_1 = arith.constant 0 : index
    %c0_2 = arith.constant 0 : index
    %7 = vector.load %arg4[%c0, %c0_1, %c0_2] : memref<1x8x32xbf16, #tpu.memory_space<vmem>>, vector<1x8x32xbf16>
    %8 = vector.shape_cast %7 : vector<1x8x32xbf16> to vector<8x32xbf16>
    %c0_3 = arith.constant 0 : index
    %c0_4 = arith.constant 0 : index
    %c0_5 = arith.constant 0 : index
    %9 = vector.load %arg5[%c0_3, %c0_4, %c0_5] : memref<1x8x32xbf16, #tpu.memory_space<vmem>>, vector<1x8x32xbf16>
    %10 = vector.shape_cast %9 : vector<1x8x32xbf16> to vector<8x32xbf16>
    %c0_6 = arith.constant 0 : index
    %c0_7 = arith.constant 0 : index
    %c0_8 = arith.constant 0 : index
    %11 = vector.load %arg6[%c0_6, %c0_7, %c0_8] : memref<1x8x32xbf16, #tpu.memory_space<vmem>>, vector<1x8x32xbf16>
    %12 = vector.shape_cast %11 : vector<1x8x32xbf16> to vector<8x32xbf16>
    %13 = tpu.iota {dimensions = array<i32: 0>} : vector<8x8xi32>
    %14 = tpu.iota {dimensions = array<i32: 1>} : vector<8x8xi32>
    %15 = arith.cmpi eq, %3, %1 : i32
    %16 = arith.cmpi slt, %13, %14 : vector<8x8xi32>
    %17 = vector.broadcast %15 : i1 to vector<8x8xi1>
    %18 = arith.andi %17, %16 : vector<8x8xi1>
    %cst = arith.constant -1.000000e+30 : f32
    %cst_9 = arith.constant 0.000000e+00 : f32
    %19 = vector.broadcast %cst : f32 to vector<8x8xf32>
    %20 = vector.broadcast %cst_9 : f32 to vector<8x8xf32>
    %21 = arith.select %18, %19, %20 : vector<8x8xi1>, vector<8x8xf32>
    %22 = vector.extract_strided_slice %8 {offsets = [0, 0], sizes = [8, 8], strides = [1, 1]} : vector<8x32xbf16> to vector<8x8xbf16>
    %23 = vector.extract_strided_slice %10 {offsets = [0, 0], sizes = [8, 8], strides = [1, 1]} : vector<8x32xbf16> to vector<8x8xbf16>
    %24 = vector.extract_strided_slice %12 {offsets = [0, 0], sizes = [8, 8], strides = [1, 1]} : vector<8x32xbf16> to vector<8x8xbf16>
    %cst_10 = arith.constant dense<0.000000e+00> : vector<8x8xf32>
    %25 = tpu.matmul %22, %23, %cst_10 {dimension_numbers = #tpu.dot_dimension_numbers<[1], [1], [0], [0], [0, 0, 1, 0], [], []>} : vector<8x8xbf16>, vector<8x8xbf16>, vector<8x8xf32> -> vector<8x8xf32>
    %26 = arith.addf %25, %21 : vector<8x8xf32>
    %c0_11 = arith.constant 0 : index
    %c0_12 = arith.constant 0 : index
    %c0_13 = arith.constant 0 : index
    %27 = vector.load %arg10[%c0_11, %c0_12, %c0_13] : memref<4x8x1xf32, #tpu.memory_space<vmem>>, vector<1x8x1xf32>
    %28 = vector.shape_cast %27 : vector<1x8x1xf32> to vector<8x1xf32>
    %cst_14 = arith.constant dense<0xFF800000> : vector<8xf32>
    %29 = vector.multi_reduction <maximumf>, %26, %cst_14 [1] : vector<8x8xf32> to vector<8xf32>
    %30 = vector.shape_cast %29 : vector<8xf32> to vector<8x1xf32>
    %31 = arith.maximumf %28, %30 : vector<8x1xf32>
    %32 = arith.subf %28, %31 : vector<8x1xf32>
    %33 = math.exp %32 : vector<8x1xf32>
    %34 = vector.broadcast %31 : vector<8x1xf32> to vector<8x8xf32>
    %35 = arith.subf %26, %34 : vector<8x8xf32>
    %36 = math.exp %35 : vector<8x8xf32>
    %37 = arith.truncf %36 : vector<8x8xf32> to vector<8x8xbf16>
    %cst_15 = arith.constant dense<0.000000e+00> : vector<8xf32>
    %38 = vector.multi_reduction <add>, %36, %cst_15 [1] : vector<8x8xf32> to vector<8xf32>
    %39 = vector.shape_cast %38 : vector<8xf32> to vector<8x1xf32>
    %c0_16 = arith.constant 0 : index
    %c0_17 = arith.constant 0 : index
    %c0_18 = arith.constant 0 : index
    %40 = vector.load %arg11[%c0_16, %c0_17, %c0_18] : memref<4x8x1xf32, #tpu.memory_space<vmem>>, vector<1x8x1xf32>
    %41 = vector.shape_cast %40 : vector<1x8x1xf32> to vector<8x1xf32>
    %42 = arith.mulf %33, %41 : vector<8x1xf32>
    %43 = arith.addf %42, %39 : vector<8x1xf32>
    %c0_19 = arith.constant 0 : index
    %c0_20 = arith.constant 0 : index
    %c0_21 = arith.constant 0 : index
    %44 = vector.load %arg11[%c0_19, %c0_20, %c0_21] : memref<4x8x1xf32, #tpu.memory_space<vmem>>, vector<1x8x1xf32>
    %45 = vector.shape_cast %44 : vector<1x8x1xf32> to vector<8x1xf32>
    %46 = vector.shape_cast %43 : vector<8x1xf32> to vector<1x8x1xf32>
    tpu.vector_store %arg11[%c0_19, %c0_20, %c0_21], %46 {strides = array<i32>} : memref<4x8x1xf32, #tpu.memory_space<vmem>>, vector<1x8x1xf32>,
    %c0_22 = arith.constant 0 : index
    %c0_23 = arith.constant 0 : index
    %c0_24 = arith.constant 0 : index
    %47 = vector.load %arg12[%c0_22, %c0_23, %c0_24] : memref<4x8x8xf32, #tpu.memory_space<vmem>>, vector<1x8x8xf32>
    %48 = vector.shape_cast %47 : vector<1x8x8xf32> to vector<8x8xf32>
    %49 = vector.broadcast %33 : vector<8x1xf32> to vector<8x8xf32>
    %50 = arith.mulf %49, %48 : vector<8x8xf32>
    %cst_25 = arith.constant dense<0.000000e+00> : vector<8x8xf32>
    %51 = tpu.matmul %37, %24, %cst_25 {dimension_numbers = #tpu.dot_dimension_numbers<[1], [0], [0], [1], [0, 0, 1, 1], [], []>} : vector<8x8xbf16>, vector<8x8xbf16>, vector<8x8xf32> -> vector<8x8xf32>
    %52 = arith.addf %50, %51 : vector<8x8xf32>
    %c0_26 = arith.constant 0 : index
    %c0_27 = arith.constant 0 : index
    %c0_28 = arith.constant 0 : index
    %53 = vector.load %arg12[%c0_26, %c0_27, %c0_28] : memref<4x8x8xf32, #tpu.memory_space<vmem>>, vector<1x8x8xf32>
    %54 = vector.shape_cast %53 : vector<1x8x8xf32> to vector<8x8xf32>
    %55 = vector.shape_cast %52 : vector<8x8xf32> to vector<1x8x8xf32>
    tpu.vector_store %arg12[%c0_26, %c0_27, %c0_28], %55 {strides = array<i32>} : memref<4x8x8xf32, #tpu.memory_space<vmem>>, vector<1x8x8xf32>,
    %c0_29 = arith.constant 0 : index
    %c0_30 = arith.constant 0 : index
    %c0_31 = arith.constant 0 : index
    %56 = vector.load %arg10[%c0_29, %c0_30, %c0_31] : memref<4x8x1xf32, #tpu.memory_space<vmem>>, vector<1x8x1xf32>
    %57 = vector.shape_cast %56 : vector<1x8x1xf32> to vector<8x1xf32>
    %58 = vector.shape_cast %31 : vector<8x1xf32> to vector<1x8x1xf32>
    tpu.vector_store %arg10[%c0_29, %c0_30, %c0_31], %58 {strides = array<i32>} : memref<4x8x1xf32, #tpu.memory_space<vmem>>, vector<1x8x1xf32>,
    %59 = vector.extract_strided_slice %8 {offsets = [0, 8], sizes = [8, 8], strides = [1, 1]} : vector<8x32xbf16> to vector<8x8xbf16>
    %60 = vector.extract_strided_slice %10 {offsets = [0, 8], sizes = [8, 8], strides = [1, 1]} : vector<8x32xbf16> to vector<8x8xbf16>
    %61 = vector.extract_strided_slice %12 {offsets = [0, 8], sizes = [8, 8], strides = [1, 1]} : vector<8x32xbf16> to vector<8x8xbf16>
    %cst_32 = arith.constant dense<0.000000e+00> : vector<8x8xf32>
    %62 = tpu.matmul %59, %60, %cst_32 {dimension_numbers = #tpu.dot_dimension_numbers<[1], [1], [0], [0], [0, 0, 1, 0], [], []>} : vector<8x8xbf16>, vector<8x8xbf16>, vector<8x8xf32> -> vector<8x8xf32>
    %63 = arith.addf %62, %21 : vector<8x8xf32>
    %c1 = arith.constant 1 : index
    %c0_33 = arith.constant 0 : index
    %c0_34 = arith.constant 0 : index
    %64 = vector.load %arg10[%c1, %c0_33, %c0_34] : memref<4x8x1xf32, #tpu.memory_space<vmem>>, vector<1x8x1xf32>
    %65 = vector.shape_cast %64 : vector<1x8x1xf32> to vector<8x1xf32>
    %cst_35 = arith.constant dense<0xFF800000> : vector<8xf32>
    %66 = vector.multi_reduction <maximumf>, %63, %cst_35 [1] : vector<8x8xf32> to vector<8xf32>
    %67 = vector.shape_cast %66 : vector<8xf32> to vector<8x1xf32>
    %68 = arith.maximumf %65, %67 : vector<8x1xf32>
    %69 = arith.subf %65, %68 : vector<8x1xf32>
    %70 = math.exp %69 : vector<8x1xf32>
    %71 = vector.broadcast %68 : vector<8x1xf32> to vector<8x8xf32>
    %72 = arith.subf %63, %71 : vector<8x8xf32>
    %73 = math.exp %72 : vector<8x8xf32>
    %74 = arith.truncf %73 : vector<8x8xf32> to vector<8x8xbf16>
    %cst_36 = arith.constant dense<0.000000e+00> : vector<8xf32>
    %75 = vector.multi_reduction <add>, %73, %cst_36 [1] : vector<8x8xf32> to vector<8xf32>
    %76 = vector.shape_cast %75 : vector<8xf32> to vector<8x1xf32>
    %c1_37 = arith.constant 1 : index
    %c0_38 = arith.constant 0 : index
    %c0_39 = arith.constant 0 : index
    %77 = vector.load %arg11[%c1_37, %c0_38, %c0_39] : memref<4x8x1xf32, #tpu.memory_space<vmem>>, vector<1x8x1xf32>
    %78 = vector.shape_cast %77 : vector<1x8x1xf32> to vector<8x1xf32>
    %79 = arith.mulf %70, %78 : vector<8x1xf32>
    %80 = arith.addf %79, %76 : vector<8x1xf32>
    %c1_40 = arith.constant 1 : index
    %c0_41 = arith.constant 0 : index
    %c0_42 = arith.constant 0 : index
    %81 = vector.load %arg11[%c1_40, %c0_41, %c0_42] : memref<4x8x1xf32, #tpu.memory_space<vmem>>, vector<1x8x1xf32>
    %82 = vector.shape_cast %81 : vector<1x8x1xf32> to vector<8x1xf32>
    %83 = vector.shape_cast %80 : vector<8x1xf32> to vector<1x8x1xf32>
    tpu.vector_store %arg11[%c1_40, %c0_41, %c0_42], %83 {strides = array<i32>} : memref<4x8x1xf32, #tpu.memory_space<vmem>>, vector<1x8x1xf32>,
    %c1_43 = arith.constant 1 : index
    %c0_44 = arith.constant 0 : index
    %c0_45 = arith.constant 0 : index
    %84 = vector.load %arg12[%c1_43, %c0_44, %c0_45] : memref<4x8x8xf32, #tpu.memory_space<vmem>>, vector<1x8x8xf32>
    %85 = vector.shape_cast %84 : vector<1x8x8xf32> to vector<8x8xf32>
    %86 = vector.broadcast %70 : vector<8x1xf32> to vector<8x8xf32>
    %87 = arith.mulf %86, %85 : vector<8x8xf32>
    %cst_46 = arith.constant dense<0.000000e+00> : vector<8x8xf32>
    %88 = tpu.matmul %74, %61, %cst_46 {dimension_numbers = #tpu.dot_dimension_numbers<[1], [0], [0], [1], [0, 0, 1, 1], [], []>} : vector<8x8xbf16>, vector<8x8xbf16>, vector<8x8xf32> -> vector<8x8xf32>
    %89 = arith.addf %87, %88 : vector<8x8xf32>
    %c1_47 = arith.constant 1 : index
    %c0_48 = arith.constant 0 : index
    %c0_49 = arith.constant 0 : index
    %90 = vector.load %arg12[%c1_47, %c0_48, %c0_49] : memref<4x8x8xf32, #tpu.memory_space<vmem>>, vector<1x8x8xf32>
    %91 = vector.shape_cast %90 : vector<1x8x8xf32> to vector<8x8xf32>
    %92 = vector.shape_cast %89 : vector<8x8xf32> to vector<1x8x8xf32>
    tpu.vector_store %arg12[%c1_47, %c0_48, %c0_49], %92 {strides = array<i32>} : memref<4x8x8xf32, #tpu.memory_space<vmem>>, vector<1x8x8xf32>,
    %c1_50 = arith.constant 1 : index
    %c0_51 = arith.constant 0 : index
    %c0_52 = arith.constant 0 : index
    %93 = vector.load %arg10[%c1_50, %c0_51, %c0_52] : memref<4x8x1xf32, #tpu.memory_space<vmem>>, vector<1x8x1xf32>
    %94 = vector.shape_cast %93 : vector<1x8x1xf32> to vector<8x1xf32>
    %95 = vector.shape_cast %68 : vector<8x1xf32> to vector<1x8x1xf32>
    tpu.vector_store %arg10[%c1_50, %c0_51, %c0_52], %95 {strides = array<i32>} : memref<4x8x1xf32, #tpu.memory_space<vmem>>, vector<1x8x1xf32>,
    %96 = vector.extract_strided_slice %8 {offsets = [0, 16], sizes = [8, 8], strides = [1, 1]} : vector<8x32xbf16> to vector<8x8xbf16>
    %97 = vector.extract_strided_slice %10 {offsets = [0, 16], sizes = [8, 8], strides = [1, 1]} : vector<8x32xbf16> to vector<8x8xbf16>
    %98 = vector.extract_strided_slice %12 {offsets = [0, 16], sizes = [8, 8], strides = [1, 1]} : vector<8x32xbf16> to vector<8x8xbf16>
    %cst_53 = arith.constant dense<0.000000e+00> : vector<8x8xf32>
    %99 = tpu.matmul %96, %97, %cst_53 {dimension_numbers = #tpu.dot_dimension_numbers<[1], [1], [0], [0], [0, 0, 1, 0], [], []>} : vector<8x8xbf16>, vector<8x8xbf16>, vector<8x8xf32> -> vector<8x8xf32>
    %100 = arith.addf %99, %21 : vector<8x8xf32>
    %c2 = arith.constant 2 : index
    %c0_54 = arith.constant 0 : index
    %c0_55 = arith.constant 0 : index
    %101 = vector.load %arg10[%c2, %c0_54, %c0_55] : memref<4x8x1xf32, #tpu.memory_space<vmem>>, vector<1x8x1xf32>
    %102 = vector.shape_cast %101 : vector<1x8x1xf32> to vector<8x1xf32>
    %cst_56 = arith.constant dense<0xFF800000> : vector<8xf32>
    %103 = vector.multi_reduction <maximumf>, %100, %cst_56 [1] : vector<8x8xf32> to vector<8xf32>
    %104 = vector.shape_cast %103 : vector<8xf32> to vector<8x1xf32>
    %105 = arith.maximumf %102, %104 : vector<8x1xf32>
    %106 = arith.subf %102, %105 : vector<8x1xf32>
    %107 = math.exp %106 : vector<8x1xf32>
    %108 = vector.broadcast %105 : vector<8x1xf32> to vector<8x8xf32>
    %109 = arith.subf %100, %108 : vector<8x8xf32>
    %110 = math.exp %109 : vector<8x8xf32>
    %111 = arith.truncf %110 : vector<8x8xf32> to vector<8x8xbf16>
    %cst_57 = arith.constant dense<0.000000e+00> : vector<8xf32>
    %112 = vector.multi_reduction <add>, %110, %cst_57 [1] : vector<8x8xf32> to vector<8xf32>
    %113 = vector.shape_cast %112 : vector<8xf32> to vector<8x1xf32>
    %c2_58 = arith.constant 2 : index
    %c0_59 = arith.constant 0 : index
    %c0_60 = arith.constant 0 : index
    %114 = vector.load %arg11[%c2_58, %c0_59, %c0_60] : memref<4x8x1xf32, #tpu.memory_space<vmem>>, vector<1x8x1xf32>
    %115 = vector.shape_cast %114 : vector<1x8x1xf32> to vector<8x1xf32>
    %116 = arith.mulf %107, %115 : vector<8x1xf32>
    %117 = arith.addf %116, %113 : vector<8x1xf32>
    %c2_61 = arith.constant 2 : index
    %c0_62 = arith.constant 0 : index
    %c0_63 = arith.constant 0 : index
    %118 = vector.load %arg11[%c2_61, %c0_62, %c0_63] : memref<4x8x1xf32, #tpu.memory_space<vmem>>, vector<1x8x1xf32>
    %119 = vector.shape_cast %118 : vector<1x8x1xf32> to vector<8x1xf32>
    %120 = vector.shape_cast %117 : vector<8x1xf32> to vector<1x8x1xf32>
    tpu.vector_store %arg11[%c2_61, %c0_62, %c0_63], %120 {strides = array<i32>} : memref<4x8x1xf32, #tpu.memory_space<vmem>>, vector<1x8x1xf32>,
    %c2_64 = arith.constant 2 : index
    %c0_65 = arith.constant 0 : index
    %c0_66 = arith.constant 0 : index
    %121 = vector.load %arg12[%c2_64, %c0_65, %c0_66] : memref<4x8x8xf32, #tpu.memory_space<vmem>>, vector<1x8x8xf32>
    %122 = vector.shape_cast %121 : vector<1x8x8xf32> to vector<8x8xf32>
    %123 = vector.broadcast %107 : vector<8x1xf32> to vector<8x8xf32>
    %124 = arith.mulf %123, %122 : vector<8x8xf32>
    %cst_67 = arith.constant dense<0.000000e+00> : vector<8x8xf32>
    %125 = tpu.matmul %111, %98, %cst_67 {dimension_numbers = #tpu.dot_dimension_numbers<[1], [0], [0], [1], [0, 0, 1, 1], [], []>} : vector<8x8xbf16>, vector<8x8xbf16>, vector<8x8xf32> -> vector<8x8xf32>
    %126 = arith.addf %124, %125 : vector<8x8xf32>
    %c2_68 = arith.constant 2 : index
    %c0_69 = arith.constant 0 : index
    %c0_70 = arith.constant 0 : index
    %127 = vector.load %arg12[%c2_68, %c0_69, %c0_70] : memref<4x8x8xf32, #tpu.memory_space<vmem>>, vector<1x8x8xf32>
    %128 = vector.shape_cast %127 : vector<1x8x8xf32> to vector<8x8xf32>
    %129 = vector.shape_cast %126 : vector<8x8xf32> to vector<1x8x8xf32>
    tpu.vector_store %arg12[%c2_68, %c0_69, %c0_70], %129 {strides = array<i32>} : memref<4x8x8xf32, #tpu.memory_space<vmem>>, vector<1x8x8xf32>,
    %c2_71 = arith.constant 2 : index
    %c0_72 = arith.constant 0 : index
    %c0_73 = arith.constant 0 : index
    %130 = vector.load %arg10[%c2_71, %c0_72, %c0_73] : memref<4x8x1xf32, #tpu.memory_space<vmem>>, vector<1x8x1xf32>
    %131 = vector.shape_cast %130 : vector<1x8x1xf32> to vector<8x1xf32>
    %132 = vector.shape_cast %105 : vector<8x1xf32> to vector<1x8x1xf32>
    tpu.vector_store %arg10[%c2_71, %c0_72, %c0_73], %132 {strides = array<i32>} : memref<4x8x1xf32, #tpu.memory_space<vmem>>, vector<1x8x1xf32>,
    %133 = vector.extract_strided_slice %8 {offsets = [0, 24], sizes = [8, 8], strides = [1, 1]} : vector<8x32xbf16> to vector<8x8xbf16>
    %134 = vector.extract_strided_slice %10 {offsets = [0, 24], sizes = [8, 8], strides = [1, 1]} : vector<8x32xbf16> to vector<8x8xbf16>
    %135 = vector.extract_strided_slice %12 {offsets = [0, 24], sizes = [8, 8], strides = [1, 1]} : vector<8x32xbf16> to vector<8x8xbf16>
    %cst_74 = arith.constant dense<0.000000e+00> : vector<8x8xf32>
    %136 = tpu.matmul %133, %134, %cst_74 {dimension_numbers = #tpu.dot_dimension_numbers<[1], [1], [0], [0], [0, 0, 1, 0], [], []>} : vector<8x8xbf16>, vector<8x8xbf16>, vector<8x8xf32> -> vector<8x8xf32>
    %137 = arith.addf %136, %21 : vector<8x8xf32>
    %c3 = arith.constant 3 : index
    %c0_75 = arith.constant 0 : index
    %c0_76 = arith.constant 0 : index
    %138 = vector.load %arg10[%c3, %c0_75, %c0_76] : memref<4x8x1xf32, #tpu.memory_space<vmem>>, vector<1x8x1xf32>
    %139 = vector.shape_cast %138 : vector<1x8x1xf32> to vector<8x1xf32>
    %cst_77 = arith.constant dense<0xFF800000> : vector<8xf32>
    %140 = vector.multi_reduction <maximumf>, %137, %cst_77 [1] : vector<8x8xf32> to vector<8xf32>
    %141 = vector.shape_cast %140 : vector<8xf32> to vector<8x1xf32>
    %142 = arith.maximumf %139, %141 : vector<8x1xf32>
    %143 = arith.subf %139, %142 : vector<8x1xf32>
    %144 = math.exp %143 : vector<8x1xf32>
    %145 = vector.broadcast %142 : vector<8x1xf32> to vector<8x8xf32>
    %146 = arith.subf %137, %145 : vector<8x8xf32>
    %147 = math.exp %146 : vector<8x8xf32>
    %148 = arith.truncf %147 : vector<8x8xf32> to vector<8x8xbf16>
    %cst_78 = arith.constant dense<0.000000e+00> : vector<8xf32>
    %149 = vector.multi_reduction <add>, %147, %cst_78 [1] : vector<8x8xf32> to vector<8xf32>
    %150 = vector.shape_cast %149 : vector<8xf32> to vector<8x1xf32>
    %c3_79 = arith.constant 3 : index
    %c0_80 = arith.constant 0 : index
    %c0_81 = arith.constant 0 : index
    %151 = vector.load %arg11[%c3_79, %c0_80, %c0_81] : memref<4x8x1xf32, #tpu.memory_space<vmem>>, vector<1x8x1xf32>
    %152 = vector.shape_cast %151 : vector<1x8x1xf32> to vector<8x1xf32>
    %153 = arith.mulf %144, %152 : vector<8x1xf32>
    %154 = arith.addf %153, %150 : vector<8x1xf32>
    %c3_82 = arith.constant 3 : index
    %c0_83 = arith.constant 0 : index
    %c0_84 = arith.constant 0 : index
    %155 = vector.load %arg11[%c3_82, %c0_83, %c0_84] : memref<4x8x1xf32, #tpu.memory_space<vmem>>, vector<1x8x1xf32>
    %156 = vector.shape_cast %155 : vector<1x8x1xf32> to vector<8x1xf32>
    %157 = vector.shape_cast %154 : vector<8x1xf32> to vector<1x8x1xf32>
    tpu.vector_store %arg11[%c3_82, %c0_83, %c0_84], %157 {strides = array<i32>} : memref<4x8x1xf32, #tpu.memory_space<vmem>>, vector<1x8x1xf32>,
    %c3_85 = arith.constant 3 : index
    %c0_86 = arith.constant 0 : index
    %c0_87 = arith.constant 0 : index
    %158 = vector.load %arg12[%c3_85, %c0_86, %c0_87] : memref<4x8x8xf32, #tpu.memory_space<vmem>>, vector<1x8x8xf32>
    %159 = vector.shape_cast %158 : vector<1x8x8xf32> to vector<8x8xf32>
    %160 = vector.broadcast %144 : vector<8x1xf32> to vector<8x8xf32>
    %161 = arith.mulf %160, %159 : vector<8x8xf32>
    %cst_88 = arith.constant dense<0.000000e+00> : vector<8x8xf32>
    %162 = tpu.matmul %148, %135, %cst_88 {dimension_numbers = #tpu.dot_dimension_numbers<[1], [0], [0], [1], [0, 0, 1, 1], [], []>} : vector<8x8xbf16>, vector<8x8xbf16>, vector<8x8xf32> -> vector<8x8xf32>
    %163 = arith.addf %161, %162 : vector<8x8xf32>
    %c3_89 = arith.constant 3 : index
    %c0_90 = arith.constant 0 : index
    %c0_91 = arith.constant 0 : index
    %164 = vector.load %arg12[%c3_89, %c0_90, %c0_91] : memref<4x8x8xf32, #tpu.memory_space<vmem>>, vector<1x8x8xf32>
    %165 = vector.shape_cast %164 : vector<1x8x8xf32> to vector<8x8xf32>
    %166 = vector.shape_cast %163 : vector<8x8xf32> to vector<1x8x8xf32>
    tpu.vector_store %arg12[%c3_89, %c0_90, %c0_91], %166 {strides = array<i32>} : memref<4x8x8xf32, #tpu.memory_space<vmem>>, vector<1x8x8xf32>,
    %c3_92 = arith.constant 3 : index
    %c0_93 = arith.constant 0 : index
    %c0_94 = arith.constant 0 : index
    %167 = vector.load %arg10[%c3_92, %c0_93, %c0_94] : memref<4x8x1xf32, #tpu.memory_space<vmem>>, vector<1x8x1xf32>
    %168 = vector.shape_cast %167 : vector<1x8x1xf32> to vector<8x1xf32>
    %169 = vector.shape_cast %142 : vector<8x1xf32> to vector<1x8x1xf32>
    tpu.vector_store %arg10[%c3_92, %c0_93, %c0_94], %169 {strides = array<i32>} : memref<4x8x1xf32, #tpu.memory_space<vmem>>, vector<1x8x1xf32>,
    %170 = arith.extui %15 : i1 to i32
    %c0_i32_95 = arith.constant 0 : i32
    %171 = arith.cmpi ne, %170, %c0_i32_95 : i32
    scf.if %171 {
      %c0_96 = arith.constant 0 : index
      %c0_97 = arith.constant 0 : index
      %c0_98 = arith.constant 0 : index
      %172 = vector.load %arg11[%c0_96, %c0_97, %c0_98] : memref<4x8x1xf32, #tpu.memory_space<vmem>>, vector<1x8x1xf32>
      %173 = vector.shape_cast %172 : vector<1x8x1xf32> to vector<8x1xf32>
      %174 = tpu.reciprocal %173 {approx = true} : vector<8x1xf32> -> vector<8x1xf32>
      %c0_99 = arith.constant 0 : index
      %c0_100 = arith.constant 0 : index
      %c0_101 = arith.constant 0 : index
      %175 = vector.load %arg12[%c0_99, %c0_100, %c0_101] : memref<4x8x8xf32, #tpu.memory_space<vmem>>, vector<1x8x8xf32>
      %176 = vector.shape_cast %175 : vector<1x8x8xf32> to vector<8x8xf32>
      %177 = vector.broadcast %174 : vector<8x1xf32> to vector<8x8xf32>
      %178 = arith.mulf %176, %177 : vector<8x8xf32>
      %179 = arith.truncf %178 : vector<8x8xf32> to vector<8x8xbf16>
      %c0_102 = arith.constant 0 : index
      %c0_103 = arith.constant 0 : index
      %180 = vector.load %arg7[%c0_102, %c0_103] : memref<32x32xbf16, #tpu.memory_space<vmem>>, vector<8x32xbf16>
      %cst_104 = arith.constant dense<0.000000e+00> : vector<8x32xf32>
      %181 = tpu.matmul %179, %180, %cst_104 {dimension_numbers = #tpu.dot_dimension_numbers<[1], [0], [0], [1], [0, 0, 1, 1], [], []>} : vector<8x8xbf16>, vector<8x32xbf16>, vector<8x32xf32> -> vector<8x32xf32>
      %c1_105 = arith.constant 1 : index
      %c0_106 = arith.constant 0 : index
      %c0_107 = arith.constant 0 : index
      %182 = vector.load %arg11[%c1_105, %c0_106, %c0_107] : memref<4x8x1xf32, #tpu.memory_space<vmem>>, vector<1x8x1xf32>
      %183 = vector.shape_cast %182 : vector<1x8x1xf32> to vector<8x1xf32>
      %184 = tpu.reciprocal %183 {approx = true} : vector<8x1xf32> -> vector<8x1xf32>
      %c1_108 = arith.constant 1 : index
      %c0_109 = arith.constant 0 : index
      %c0_110 = arith.constant 0 : index
      %185 = vector.load %arg12[%c1_108, %c0_109, %c0_110] : memref<4x8x8xf32, #tpu.memory_space<vmem>>, vector<1x8x8xf32>
      %186 = vector.shape_cast %185 : vector<1x8x8xf32> to vector<8x8xf32>
      %187 = vector.broadcast %184 : vector<8x1xf32> to vector<8x8xf32>
      %188 = arith.mulf %186, %187 : vector<8x8xf32>
      %189 = arith.truncf %188 : vector<8x8xf32> to vector<8x8xbf16>
      %c8 = arith.constant 8 : index
      %c0_111 = arith.constant 0 : index
      %190 = vector.load %arg7[%c8, %c0_111] : memref<32x32xbf16, #tpu.memory_space<vmem>>, vector<8x32xbf16>
      %cst_112 = arith.constant dense<0.000000e+00> : vector<8x32xf32>
      %191 = tpu.matmul %189, %190, %cst_112 {dimension_numbers = #tpu.dot_dimension_numbers<[1], [0], [0], [1], [0, 0, 1, 1], [], []>} : vector<8x8xbf16>, vector<8x32xbf16>, vector<8x32xf32> -> vector<8x32xf32>
      %192 = arith.addf %181, %191 : vector<8x32xf32>
      %c2_113 = arith.constant 2 : index
      %c0_114 = arith.constant 0 : index
      %c0_115 = arith.constant 0 : index
      %193 = vector.load %arg11[%c2_113, %c0_114, %c0_115] : memref<4x8x1xf32, #tpu.memory_space<vmem>>, vector<1x8x1xf32>
      %194 = vector.shape_cast %193 : vector<1x8x1xf32> to vector<8x1xf32>
      %195 = tpu.reciprocal %194 {approx = true} : vector<8x1xf32> -> vector<8x1xf32>
      %c2_116 = arith.constant 2 : index
      %c0_117 = arith.constant 0 : index
      %c0_118 = arith.constant 0 : index
      %196 = vector.load %arg12[%c2_116, %c0_117, %c0_118] : memref<4x8x8xf32, #tpu.memory_space<vmem>>, vector<1x8x8xf32>
      %197 = vector.shape_cast %196 : vector<1x8x8xf32> to vector<8x8xf32>
      %198 = vector.broadcast %195 : vector<8x1xf32> to vector<8x8xf32>
      %199 = arith.mulf %197, %198 : vector<8x8xf32>
      %200 = arith.truncf %199 : vector<8x8xf32> to vector<8x8xbf16>
      %c16 = arith.constant 16 : index
      %c0_119 = arith.constant 0 : index
      %201 = vector.load %arg7[%c16, %c0_119] : memref<32x32xbf16, #tpu.memory_space<vmem>>, vector<8x32xbf16>
      %cst_120 = arith.constant dense<0.000000e+00> : vector<8x32xf32>
      %202 = tpu.matmul %200, %201, %cst_120 {dimension_numbers = #tpu.dot_dimension_numbers<[1], [0], [0], [1], [0, 0, 1, 1], [], []>} : vector<8x8xbf16>, vector<8x32xbf16>, vector<8x32xf32> -> vector<8x32xf32>
      %203 = arith.addf %192, %202 : vector<8x32xf32>
      %c3_121 = arith.constant 3 : index
      %c0_122 = arith.constant 0 : index
      %c0_123 = arith.constant 0 : index
      %204 = vector.load %arg11[%c3_121, %c0_122, %c0_123] : memref<4x8x1xf32, #tpu.memory_space<vmem>>, vector<1x8x1xf32>
      %205 = vector.shape_cast %204 : vector<1x8x1xf32> to vector<8x1xf32>
      %206 = tpu.reciprocal %205 {approx = true} : vector<8x1xf32> -> vector<8x1xf32>
      %c3_124 = arith.constant 3 : index
      %c0_125 = arith.constant 0 : index
      %c0_126 = arith.constant 0 : index
      %207 = vector.load %arg12[%c3_124, %c0_125, %c0_126] : memref<4x8x8xf32, #tpu.memory_space<vmem>>, vector<1x8x8xf32>
      %208 = vector.shape_cast %207 : vector<1x8x8xf32> to vector<8x8xf32>
      %209 = vector.broadcast %206 : vector<8x1xf32> to vector<8x8xf32>
      %210 = arith.mulf %208, %209 : vector<8x8xf32>
      %211 = arith.truncf %210 : vector<8x8xf32> to vector<8x8xbf16>
      %c24 = arith.constant 24 : index
      %c0_127 = arith.constant 0 : index
      %212 = vector.load %arg7[%c24, %c0_127] : memref<32x32xbf16, #tpu.memory_space<vmem>>, vector<8x32xbf16>
      %cst_128 = arith.constant dense<0.000000e+00> : vector<8x32xf32>
      %213 = tpu.matmul %211, %212, %cst_128 {dimension_numbers = #tpu.dot_dimension_numbers<[1], [0], [0], [1], [0, 0, 1, 1], [], []>} : vector<8x8xbf16>, vector<8x32xbf16>, vector<8x32xf32> -> vector<8x32xf32>
      %214 = arith.addf %203, %213 : vector<8x32xf32>
      %c0_129 = arith.constant 0 : index
      %c0_130 = arith.constant 0 : index
      %215 = vector.load %arg8[%c0_129, %c0_130] : memref<1x32xf32, #tpu.memory_space<vmem>>, vector<1x32xf32>
      %216 = vector.broadcast %215 : vector<1x32xf32> to vector<8x32xf32>
      %217 = arith.addf %214, %216 : vector<8x32xf32>
      %c0_131 = arith.constant 0 : index
      %c0_132 = arith.constant 0 : index
      %c0_133 = arith.constant 0 : index
      %218 = vector.load %arg9[%c0_131, %c0_132, %c0_133] : memref<1x8x32xf32, #tpu.memory_space<vmem>>, vector<1x8x32xf32>
      %219 = vector.shape_cast %218 : vector<1x8x32xf32> to vector<8x32xf32>
      %220 = vector.shape_cast %217 : vector<8x32xf32> to vector<1x8x32xf32>
      tpu.vector_store %arg9[%c0_131, %c0_132, %c0_133], %220 {strides = array<i32>} : memref<1x8x32xf32, #tpu.memory_space<vmem>>, vector<1x8x32xf32>,
    } else {
    }
    return
  }
  func.func @transform_0(%arg0: i32, %arg1: i32, %arg2: memref<1xi32, #tpu.memory_space<smem>>, %arg3: memref<1xi32, #tpu.memory_space<smem>>) -> (i32, i32, i32) {
    %0 = arith.index_cast %arg1 : i32 to index
    %1 = memref.load %arg2[%0] : memref<1xi32, #tpu.memory_space<smem>>
    %c0_i32 = arith.constant 0 : i32
    %c0_i32_0 = arith.constant 0 : i32
    return %arg0, %1, %c0_i32 : i32, i32, i32
  }
  func.func @transform_1(%arg0: i32, %arg1: i32, %arg2: memref<1xi32, #tpu.memory_space<smem>>, %arg3: memref<1xi32, #tpu.memory_space<smem>>) -> (i32, i32, i32) {
    %0 = arith.index_cast %arg1 : i32 to index
    %1 = memref.load %arg3[%0] : memref<1xi32, #tpu.memory_space<smem>>
    %c0_i32 = arith.constant 0 : i32
    %c0_i32_0 = arith.constant 0 : i32
    return %arg0, %1, %c0_i32 : i32, i32, i32
  }
  func.func @transform_2(%arg0: i32, %arg1: i32, %arg2: memref<1xi32, #tpu.memory_space<smem>>, %arg3: memref<1xi32, #tpu.memory_space<smem>>) -> (i32, i32, i32) {
    %0 = arith.index_cast %arg1 : i32 to index
    %1 = memref.load %arg3[%0] : memref<1xi32, #tpu.memory_space<smem>>
    %c0_i32 = arith.constant 0 : i32
    %c0_i32_0 = arith.constant 0 : i32
    return %arg0, %1, %c0_i32 : i32, i32, i32
  }
  func.func @transform_3(%arg0: i32, %arg1: i32, %arg2: memref<1xi32, #tpu.memory_space<smem>>, %arg3: memref<1xi32, #tpu.memory_space<smem>>) -> (i32, i32) {
    %c0_i32 = arith.constant 0 : i32
    %c0_i32_0 = arith.constant 0 : i32
    %c0_i32_1 = arith.constant 0 : i32
    return %c0_i32, %c0_i32_0 : i32, i32
  }
  func.func @transform_4(%arg0: i32, %arg1: i32, %arg2: memref<1xi32, #tpu.memory_space<smem>>, %arg3: memref<1xi32, #tpu.memory_space<smem>>) -> (i32, i32) {
    %c0_i32 = arith.constant 0 : i32
    %c0_i32_0 = arith.constant 0 : i32
    %c0_i32_1 = arith.constant 0 : i32
    return %c0_i32, %c0_i32_0 : i32, i32
  }
  func.func @transform_5(%arg0: i32, %arg1: i32, %arg2: memref<1xi32, #tpu.memory_space<smem>>, %arg3: memref<1xi32, #tpu.memory_space<smem>>) -> (i32, i32, i32) {
    %0 = arith.index_cast %arg1 : i32 to index
    %1 = memref.load %arg2[%0] : memref<1xi32, #tpu.memory_space<smem>>
    %c0_i32 = arith.constant 0 : i32
    %c0_i32_0 = arith.constant 0 : i32
    return %arg0, %1, %c0_i32 : i32, i32, i32
  }
}

</mosaic_0001>

<llo_original>
// kernel: causal_self_attention.2
$region0: #{causal_self_attention.2}
  #allocation0 [shape = 'u32[]', space=smem, size = 0x4, offset = 0x4, fixed_abs, tag = 'smem constant byte address 0x4 - core index']
  #allocation1 [shape = 'u32[144,128]{1,0:T(1,128)}', space=vmem, size = 0x12000, scoped, tag = 'internal scratch']
  %s0 = inlined_call_operand.vmem [shape: f32[2,8,32], index: 0, kind: input, shape index: {}]
  %s1 = inlined_call_operand.vmem [shape: bf16[32,96], index: 1, kind: input, shape index: {}]
  %s2 = inlined_call_operand.vmem [shape: f32[1,96], index: 2, kind: input, shape index: {}]
  %s3 = inlined_call_operand.vmem [shape: bf16[2,8,32], index: 3, kind: output, shape index: {0}]
  %s4 = inlined_call_operand.vmem [shape: bf16[2,8,32], index: 4, kind: output, shape index: {1}]
  %s5 = inlined_call_operand.vmem [shape: bf16[2,8,32], index: 5, kind: output, shape index: {2}]
  %6 = xla_tuple %s3, %s4, %s5
  %s7 = sld [smem:[#allocation0]]
  $region61: #{causal_self_attention.2} parent=0
    _
  %s9 = ssub.s32 1, %s7
  %s10 = scalar_select 0, %s9, %s7
  loop: start=0, step=1, limit=4
  $region2: #{causal_self_attention.2} parent=0 // loop_pre_header
    _
  $region3: #{causal_self_attention.2} parent=0 // loop_header
    %s12 = sphi 0, %s16
    %p13 = scmp.ge.s32.totalorder %s12, 4
    %s19 = sphi 0, %s31
    %s20 = sphi 0, %s27
    %s21 = sphi 0, %s19
    %s22 = sphi 0, %s20
    %s23 = sphi 0, %s21
    %s24 = sphi 0, %s22
    %s36 = sphi 0, %s38
    %s39 = sphi 0, %s36
    %s40 = sphi 0, %s39
    %s56 = sphi 0, %s40
    %s60 = sphi 0, %s60
    %s62 = sphi 0, %s60
    %s63 = sphi 0, %s62
    %s77 = sphi 0, %s63
    %s81 = sphi 0, %s81
    %s83 = sphi 0, %s81
    %s84 = sphi 0, %s83
    %s98 = sphi 0, %s84
    %s106 = sphi 0, %s108
    %s109 = sphi 0, %s106
    %s110 = sphi 0, %s109
    %s126 = sphi 0, %s110
    %s134 = sphi 0, %s136
    %s137 = sphi 0, %s134
    %s138 = sphi 0, %s137
    %s154 = sphi 0, %s138
    %s162 = sphi 0, %s164
    %s165 = sphi 0, %s162
    %s166 = sphi 0, %s165
    %s182 = sphi 0, %s166
  $region4: #{causal_self_attention.2} parent=0 // loop_header_branch
    %15 = sbr.rel (%p13) target = $region8
  $region5: #{causal_self_attention.2} parent=0 // loop_body
    %s17 = ssub.s32 %s12, 1
    %s18 = ssub.s32 %s12, 2
    %s25 = sadd.s32 1, %s20
    %p26 = scmp.ge.s32.totalorder %s25, 1
    %s27 = scalar_select %p26, 0, %s25
    %s28 = sadd.s32 1, %s19
    %s29 = scalar_select %p26, %s28, %s19
    %p30 = scmp.ge.s32.totalorder %s29, 2
    %s31 = scalar_select %p30, 0, %s29
    %s32 = ssub.s32 %s19, %s31
    %s33 = ssub.s32 %s20, %s27
    %s34 = sor.u32 %s32, %s33
    %p35 = scmp.eq.s32.totalorder %s34, 0
    %s37 = sadd.s32 %s36, 1
    %s38 = scalar_select %p35, %s36, %s37
    %p41 = pneg %p35
    %p42 = scmp.eq.s32.totalorder %s12, 1
    %p43 = por %p41, %p42
    %p44 = scmp.ne.s32.totalorder %s36, %s39
    %p45 = scmp.eq.s32.totalorder %s12, 0
    %p46 = por %p44, %p45
    %p47 = scmp.ne.s32.totalorder %s36, %s39
    %p48 = scmp.eq.s32.totalorder %s17, 1
    %p49 = por %p47, %p48
    %p50 = scmp.ne.s32.totalorder %s39, %s40
    %p51 = scmp.eq.s32.totalorder %s17, 0
    %p52 = por %p50, %p51
    %p53 = scmp.ne.s32.totalorder %s39, %s40
    %p54 = scmp.eq.s32.totalorder %s18, 1
    %p55 = por %p53, %p54
    %p57 = scmp.ne.s32.totalorder %s40, %s56
    %p58 = scmp.eq.s32.totalorder %s18, 0
    %p59 = por %p57, %p58
    %s61 = sadd.s32 %s60, 1
    %p64 = scmp.eq.s32.totalorder %s12, 1
    %p65 = scmp.ne.s32.totalorder %s60, %s62
    %p66 = scmp.eq.s32.totalorder %s12, 0
    %p67 = por %p65, %p66
    %p68 = scmp.ne.s32.totalorder %s60, %s62
    %p69 = scmp.eq.s32.totalorder %s17, 1
    %p70 = por %p68, %p69
    %p71 = scmp.ne.s32.totalorder %s62, %s63
    %p72 = scmp.eq.s32.totalorder %s17, 0
    %p73 = por %p71, %p72
    %p74 = scmp.ne.s32.totalorder %s62, %s63
    %p75 = scmp.eq.s32.totalorder %s18, 1
    %p76 = por %p74, %p75
    %p78 = scmp.ne.s32.totalorder %s63, %s77
    %p79 = scmp.eq.s32.totalorder %s18, 0
    %p80 = por %p78, %p79
    %s82 = sadd.s32 %s81, 1
    %p85 = scmp.eq.s32.totalorder %s12, 1
    %p86 = scmp.ne.s32.totalorder %s81, %s83
    %p87 = scmp.eq.s32.totalorder %s12, 0
    %p88 = por %p86, %p87
    %p89 = scmp.ne.s32.totalorder %s81, %s83
    %p90 = scmp.eq.s32.totalorder %s17, 1
    %p91 = por %p89, %p90
    %p92 = scmp.ne.s32.totalorder %s83, %s84
    %p93 = scmp.eq.s32.totalorder %s17, 0
    %p94 = por %p92, %p93
    %p95 = scmp.ne.s32.totalorder %s83, %s84
    %p96 = scmp.eq.s32.totalorder %s18, 1
    %p97 = por %p95, %p96
    %p99 = scmp.ne.s32.totalorder %s84, %s98
    %p100 = scmp.eq.s32.totalorder %s18, 0
    %p101 = por %p99, %p100
    %s102 = ssub.s32 %s19, %s31
    %s103 = ssub.s32 %s20, %s27
    %s104 = sor.u32 %s102, %s103
    %p105 = scmp.eq.s32.totalorder %s104, 0
    %s107 = sadd.s32 %s106, 1
    %s108 = scalar_select %p105, %s106, %s107
    %p111 = pneg %p105
    %p112 = scmp.eq.s32.totalorder %s12, 1
    %p113 = por %p111, %p112
    %p114 = scmp.ne.s32.totalorder %s106, %s109
    %p115 = scmp.eq.s32.totalorder %s12, 0
    %p116 = por %p114, %p115
    %p117 = scmp.ne.s32.totalorder %s106, %s109
    %p118 = scmp.eq.s32.totalorder %s17, 1
    %p119 = por %p117, %p118
    %p120 = scmp.ne.s32.totalorder %s109, %s110
    %p121 = scmp.eq.s32.totalorder %s17, 0
    %p122 = por %p120, %p121
    %p123 = scmp.ne.s32.totalorder %s109, %s110
    %p124 = scmp.eq.s32.totalorder %s18, 1
    %p125 = por %p123, %p124
    %p127 = scmp.ne.s32.totalorder %s110, %s126
    %p128 = scmp.eq.s32.totalorder %s18, 0
    %p129 = por %p127, %p128
    %s130 = ssub.s32 %s19, %s31
    %s131 = ssub.s32 %s20, %s27
    %s132 = sor.u32 %s130, %s131
    %p133 = scmp.eq.s32.totalorder %s132, 0
    %s135 = sadd.s32 %s134, 1
    %s136 = scalar_select %p133, %s134, %s135
    %p139 = pneg %p133
    %p140 = scmp.eq.s32.totalorder %s12, 1
    %p141 = por %p139, %p140
    %p142 = scmp.ne.s32.totalorder %s134, %s137
    %p143 = scmp.eq.s32.totalorder %s12, 0
    %p144 = por %p142, %p143
    %p145 = scmp.ne.s32.totalorder %s134, %s137
    %p146 = scmp.eq.s32.totalorder %s17, 1
    %p147 = por %p145, %p146
    %p148 = scmp.ne.s32.totalorder %s137, %s138
    %p149 = scmp.eq.s32.totalorder %s17, 0
    %p150 = por %p148, %p149
    %p151 = scmp.ne.s32.totalorder %s137, %s138
    %p152 = scmp.eq.s32.totalorder %s18, 1
    %p153 = por %p151, %p152
    %p155 = scmp.ne.s32.totalorder %s138, %s154
    %p156 = scmp.eq.s32.totalorder %s18, 0
    %p157 = por %p155, %p156
    %s158 = ssub.s32 %s19, %s31
    %s159 = ssub.s32 %s20, %s27
    %s160 = sor.u32 %s158, %s159
    %p161 = scmp.eq.s32.totalorder %s160, 0
    %s163 = sadd.s32 %s162, 1
    %s164 = scalar_select %p161, %s162, %s163
    %p167 = pneg %p161
    %p168 = scmp.eq.s32.totalorder %s12, 1
    %p169 = por %p167, %p168
    %p170 = scmp.ne.s32.totalorder %s162, %s165
    %p171 = scmp.eq.s32.totalorder %s12, 0
    %p172 = por %p170, %p171
    %p173 = scmp.ne.s32.totalorder %s162, %s165
    %p174 = scmp.eq.s32.totalorder %s17, 1
    %p175 = por %p173, %p174
    %p176 = scmp.ne.s32.totalorder %s165, %s166
    %p177 = scmp.eq.s32.totalorder %s17, 0
    %p178 = por %p176, %p177
    %p179 = scmp.ne.s32.totalorder %s165, %s166
    %p180 = scmp.eq.s32.totalorder %s18, 1
    %p181 = por %p179, %p180
    %p183 = scmp.ne.s32.totalorder %s166, %s182
    %p184 = scmp.eq.s32.totalorder %s18, 0
    %p185 = por %p183, %p184
    %p186 = scmp.le.s32.totalorder 1, %s12
    %p187 = scmp.lt.s32.totalorder %s12, 3
    %p188 = pnand %p186, %p187
    %p189 = pneg %p188
    // Predicated region
    $region9: #{causal_self_attention.2} parent=5 // pred_check
      _
    $region10: #{causal_self_attention.2} parent=5 // pred_check_branch
      %191 = sbr.rel (%p188) target = $region12
    $region11: #{causal_self_attention.2} parent=5 // pred_region
      %s192 = ssub.s32 %s12, 1
      // Predicated region
      $region13: #{causal_self_attention.2} parent=11 // pred_check
        %p193 = pneg %p73
      $region14: #{causal_self_attention.2} parent=11 // pred_check_branch
        %195 = sbr.rel (%p193) target = $region16
      $region15: #{causal_self_attention.2} parent=11 // pred_region
        _
      $region16: #{causal_self_attention.2} parent=11 // pred_fallthru
        _
      // Predicated region
      $region17: #{causal_self_attention.2} parent=11 // pred_check
        %p196 = pneg %p94
      $region18: #{causal_self_attention.2} parent=11 // pred_check_branch
        %198 = sbr.rel (%p196) target = $region20
      $region19: #{causal_self_attention.2} parent=11 // pred_region
        _
      $region20: #{causal_self_attention.2} parent=11 // pred_fallthru
        _
    $region12: #{causal_self_attention.2} parent=5 // pred_fallthru
      _
    %p199 = scmp.lt.s32.totalorder %s12, 2
    // Predicated region
    $region21: #{causal_self_attention.2} parent=5 // pred_check
      %p200 = pneg %p199
    $region22: #{causal_self_attention.2} parent=5 // pred_check_branch
      %202 = sbr.rel (%p200) target = $region24
    $region23: #{causal_self_attention.2} parent=5 // pred_region
      // Predicated region
      $region25: #{causal_self_attention.2} parent=23 // pred_check
        %p203 = pneg %p46
      $region26: #{causal_self_attention.2} parent=23 // pred_check_branch
        %205 = sbr.rel (%p203) target = $region28
      $region27: #{causal_self_attention.2} parent=23 // pred_region
        %p206 = scmp.lt.s32.totalorder %s19, 1
        %s207 = scalar_select %p206, %s19, 1
        %p208 = scmp.lt.s32.totalorder %s20, 0
        %s209 = scalar_select %p208, %s20, 0
        %s210 = sadd.s32 %s209, %s207
        %s211 = smul.addr %s210, 8
        %s212 = scalar_lea.vmem %s0, %s211
      $region28: #{causal_self_attention.2} parent=23 // pred_fallthru
        _
    $region24: #{causal_self_attention.2} parent=5 // pred_fallthru
      _
    %p213 = scmp.le.s32.totalorder 1, %s12
    %p214 = scmp.lt.s32.totalorder %s12, 3
    %p215 = pnand %p213, %p214
    %p216 = pneg %p215
    // Predicated region
    $region29: #{causal_self_attention.2} parent=5 // pred_check
      _
    $region30: #{causal_self_attention.2} parent=5 // pred_check_branch
      %218 = sbr.rel (%p215) target = $region32
    $region31: #{causal_self_attention.2} parent=5 // pred_region
      %s219 = ssub.s32 %s12, 1
      %p220 = scmp.lt.s32.totalorder %s21, 1
      %s221 = scalar_select %p220, %s21, 1
      %p222 = scmp.lt.s32.totalorder %s22, 0
      %s223 = scalar_select %p222, %s22, 0
      %s224 = sadd.s32 %s223, %s221
      %s225 = smul.addr %s224, 8
      %s226 = scalar_lea.vmem %s0, %s225
      %p227 = pneg %p52
      %p228 = pneg %p49
      %p229 = pneg %p73
      %p230 = pneg %p70
      %p231 = pneg %p94
      %p232 = pneg %p91
      %p233 = pneg %p122
      %p234 = pneg %p119
      %p235 = scmp.lt.s32.totalorder %s21, 1
      %s236 = scalar_select %p235, %s21, 1
      %p237 = scmp.lt.s32.totalorder %s22, 0
      %s238 = scalar_select %p237, %s22, 0
      %s239 = sadd.s32 %s238, %s236
      %s240 = smul.addr %s239, 4
      %s241 = scalar_lea.vmem %s3, %s240
      %p242 = pneg %p150
      %p243 = pneg %p147
      %p244 = scmp.lt.s32.totalorder %s21, 1
      %s245 = scalar_select %p244, %s21, 1
      %p246 = scmp.lt.s32.totalorder %s22, 0
      %s247 = scalar_select %p246, %s22, 0
      %s248 = sadd.s32 %s247, %s245
      %s249 = smul.addr %s248, 4
      %s250 = scalar_lea.vmem %s4, %s249
      %p251 = pneg %p178
      %p252 = pneg %p175
      %p253 = scmp.lt.s32.totalorder %s21, 1
      %s254 = scalar_select %p253, %s21, 1
      %p255 = scmp.lt.s32.totalorder %s22, 0
      %s256 = scalar_select %p255, %s22, 0
      %s257 = sadd.s32 %s256, %s254
      %s258 = smul.addr %s257, 4
      %s259 = scalar_lea.vmem %s5, %s258
      %p260 = scmp.lt.s32.totalorder %s21, 1
      %s261 = scalar_select %p260, %s21, 1
      %p262 = scmp.lt.s32.totalorder %s22, 0
      %s263 = scalar_select %p262, %s22, 0
      %s264 = sadd.s32 %s263, %s261
      %s265 = smul.addr %s264, 8
      %s266 = scalar_lea.vmem %s0, %s265
      %p267 = scmp.lt.s32.totalorder %s21, 1
      %s268 = scalar_select %p267, %s21, 1
      %p269 = scmp.lt.s32.totalorder %s22, 0
      %s270 = scalar_select %p269, %s22, 0
      %s271 = sadd.s32 %s270, %s268
      %s272 = smul.addr %s271, 4
      %s273 = scalar_lea.vmem %s3, %s272
      %p274 = scmp.lt.s32.totalorder %s21, 1
      %s275 = scalar_select %p274, %s21, 1
      %p276 = scmp.lt.s32.totalorder %s22, 0
      %s277 = scalar_select %p276, %s22, 0
      %s278 = sadd.s32 %s277, %s275
      %s279 = smul.addr %s278, 4
      %s280 = scalar_lea.vmem %s4, %s279
      %p281 = scmp.lt.s32.totalorder %s21, 1
      %s282 = scalar_select %p281, %s21, 1
      %p283 = scmp.lt.s32.totalorder %s22, 0
      %s284 = scalar_select %p283, %s22, 0
      %s285 = sadd.s32 %s284, %s282
      %s286 = smul.addr %s285, 4
      %s287 = scalar_lea.vmem %s5, %s286
      %v289 = vld [vmem:[%s266] sm:$0xff]
      %v290 = vpack.c.bf16 %v289, %v289
      %v291 = vld [vmem:[%s1] sm:$0xf]
      %v292 = vld [vmem:[%s1 + $0x4] sm:$0xf]
      %v293 = vld [vmem:[%s1 + $0x8] sm:$0xf]
      %v294 = vld [vmem:[%s1 + $0xc] sm:$0xf]
      %v295 = vld [vmem:[%s2] sm:$0x1]
      %v297 = vlaneseq
      %v298 = vshrl.u32 %v297, 7
      %v299 = vsub.s32 0, %v298
      %v300 = vrot.slane %v295, %v299
      %v306 = vunpack.c.l.b16 %v291
      %v307 = vunpack.c.l.b16 %v292
      %v308 = vunpack.c.l.b16 %v293
      %v309 = vunpack.c.l.b16 %v294
      %v310 = vpack.c.b16 %v307, %v306
      %v311 = vpack.c.b16 %v309, %v308
      %vm314 = vcmask 261120
      %v316 = vsel %vm314, %v290, 0
      %318 = vmatprep.subr.bf16.mxu0 0
      %319 = vmatpush1.bf16.msra.mxu0 %v310
      %320 = vmatprep.subr.bf16.mxu0 0
      %321 = vmatpush1.bf16.msra.mxu0 %v311
      %322 = vmatprep.subr.bf16.mxu0 0
      %323 = vmatpush1.bf16.msra.mxu0 0
      %324 = vmatprep.subr.bf16.mxu0 0
      %325 = vmatpush1.bf16.msra.mxu0 0
      %326 = vmatprep.subr.bf16.mxu0 0
      %327 = vmatpush1.bf16.msra.mxu0 0
      %328 = vmatprep.subr.bf16.mxu0 0
      %329 = vmatpush1.bf16.msra.mxu0 0
      %330 = vmatprep.subr.bf16.mxu0 0
      %331 = vmatpush1.bf16.msra.mxu0 0
      %332 = vmatprep.subr.bf16.mxu0 0
      %333 = vmatpush1.bf16.msra.mxu0 0
      %334 = vmatprep.subr.bf16.mxu0 0
      %335 = vmatpush1.bf16.msra.mxu0 0
      %336 = vmatprep.subr.bf16.mxu0 0
      %337 = vmatpush1.bf16.msra.mxu0 0
      %338 = vmatprep.subr.bf16.mxu0 0
      %339 = vmatpush1.bf16.msra.mxu0 0
      %340 = vmatprep.subr.bf16.mxu0 0
      %341 = vmatpush1.bf16.msra.mxu0 0
      %342 = vmatprep.subr.bf16.mxu0 0
      %343 = vmatpush1.bf16.msra.mxu0 0
      %344 = vmatprep.subr.bf16.mxu0 0
      %345 = vmatpush1.bf16.msra.mxu0 0
      %346 = vmatprep.subr.bf16.mxu0 0
      %347 = vmatpush1.bf16.msra.mxu0 0
      %348 = vmatprep.subr.bf16.mxu0 0
      %349 = vmatpush1.bf16.msra.mxu0 0
      %350 = vmatprep.mubr.bf16.mxu0 0
      %351 = vmatmul.mubr.bf16.gmra.mrb[0].mxu0 %v316
      %v352 = vpop.f32.mrb[0].mxu0
      %v353 = vadd.f32 %v300, %v352
      %v354 = vpop.f32.mrb[0].mxu0
      %v355 = vpop.f32.mrb[0].mxu0
      %v356 = vpop.f32.mrb[0].mxu0
      %357 = vdwg.mxu0
      %v358 = vmul.f32 %v353, 0.35355338
      %v359 = vpack.c.bf16 %v358, %v358
      %vm360 = vcmask 257024
      %361 = vst.msk [vmem:[%s273] sm:$0xf] %vm360, %v359
      %v362 = vpack.c.bf16 %v353, %v353
      %v364 = vunpack.c.l.b16 %v362
      %v365 = vpack.c.b16 %v364, %v364
      %366 = vrot.lane.b32.xlu0 %v365, 96
      %v367 = vpop.permute.xlu0 %366
      %369 = vst.msk [vmem:[%s280] sm:$0xf] %vm360, %v367
      %370 = vrot.lane.b32.xlu0 %v365, 64
      %v371 = vpop.permute.xlu0 %370
      %373 = vst.msk [vmem:[%s287] sm:$0xf] %vm360, %v371
      %p374 = scmp.lt.s32.totalorder %s21, 1
      %s375 = scalar_select %p374, %s21, 1
      %p376 = scmp.lt.s32.totalorder %s22, 0
      %s377 = scalar_select %p376, %s22, 0
      %s378 = sadd.s32 %s377, %s375
      %s379 = smul.addr %s378, 4
      %s380 = scalar_lea.vmem %s3, %s379
      %p381 = scmp.lt.s32.totalorder %s21, 1
      %s382 = scalar_select %p381, %s21, 1
      %p383 = scmp.lt.s32.totalorder %s22, 0
      %s384 = scalar_select %p383, %s22, 0
      %s385 = sadd.s32 %s384, %s382
      %s386 = smul.addr %s385, 4
      %s387 = scalar_lea.vmem %s4, %s386
      %p388 = scmp.lt.s32.totalorder %s21, 1
      %s389 = scalar_select %p388, %s21, 1
      %p390 = scmp.lt.s32.totalorder %s22, 0
      %s391 = scalar_select %p390, %s22, 0
      %s392 = sadd.s32 %s391, %s389
      %s393 = smul.addr %s392, 4
      %s394 = scalar_lea.vmem %s5, %s393
      // Predicated region
      $region33: #{causal_self_attention.2} parent=31 // pred_check
        %p395 = pneg %p119
      $region34: #{causal_self_attention.2} parent=31 // pred_check_branch
        %397 = sbr.rel (%p395) target = $region36
      $region35: #{causal_self_attention.2} parent=31 // pred_region
        _
      $region36: #{causal_self_attention.2} parent=31 // pred_fallthru
        _
      // Predicated region
      $region37: #{causal_self_attention.2} parent=31 // pred_check
        %p398 = pneg %p147
      $region38: #{causal_self_attention.2} parent=31 // pred_check_branch
        %400 = sbr.rel (%p398) target = $region40
      $region39: #{causal_self_attention.2} parent=31 // pred_region
        _
      $region40: #{causal_self_attention.2} parent=31 // pred_fallthru
        _
      // Predicated region
      $region41: #{causal_self_attention.2} parent=31 // pred_check
        %p401 = pneg %p175
      $region42: #{causal_self_attention.2} parent=31 // pred_check_branch
        %403 = sbr.rel (%p401) target = $region44
      $region43: #{causal_self_attention.2} parent=31 // pred_region
        _
      $region44: #{causal_self_attention.2} parent=31 // pred_fallthru
        _
    $region32: #{causal_self_attention.2} parent=5 // pred_fallthru
      _
    %p404 = scmp.le.s32.totalorder 2, %s12
    // Predicated region
    $region45: #{causal_self_attention.2} parent=5 // pred_check
      %p405 = pneg %p404
    $region46: #{causal_self_attention.2} parent=5 // pred_check_branch
      %407 = sbr.rel (%p405) target = $region48
    $region47: #{causal_self_attention.2} parent=5 // pred_region
      %s408 = ssub.s32 %s12, 2
      // Predicated region
      $region49: #{causal_self_attention.2} parent=47 // pred_check
        %p409 = pneg %p125
      $region50: #{causal_self_attention.2} parent=47 // pred_check_branch
        %411 = sbr.rel (%p409) target = $region52
      $region51: #{causal_self_attention.2} parent=47 // pred_region
        %p412 = scmp.lt.s32.totalorder %s23, 1
        %s413 = scalar_select %p412, %s23, 1
        %p414 = scmp.lt.s32.totalorder %s24, 0
        %s415 = scalar_select %p414, %s24, 0
        %s416 = sadd.s32 %s415, %s413
        %s417 = smul.addr %s416, 4
        %s418 = scalar_lea.vmem %s3, %s417
      $region52: #{causal_self_attention.2} parent=47 // pred_fallthru
        _
      // Predicated region
      $region53: #{causal_self_attention.2} parent=47 // pred_check
        %p419 = pneg %p153
      $region54: #{causal_self_attention.2} parent=47 // pred_check_branch
        %421 = sbr.rel (%p419) target = $region56
      $region55: #{causal_self_attention.2} parent=47 // pred_region
        %p422 = scmp.lt.s32.totalorder %s23, 1
        %s423 = scalar_select %p422, %s23, 1
        %p424 = scmp.lt.s32.totalorder %s24, 0
        %s425 = scalar_select %p424, %s24, 0
        %s426 = sadd.s32 %s425, %s423
        %s427 = smul.addr %s426, 4
        %s428 = scalar_lea.vmem %s4, %s427
      $region56: #{causal_self_attention.2} parent=47 // pred_fallthru
        _
      // Predicated region
      $region57: #{causal_self_attention.2} parent=47 // pred_check
        %p429 = pneg %p181
      $region58: #{causal_self_attention.2} parent=47 // pred_check_branch
        %431 = sbr.rel (%p429) target = $region60
      $region59: #{causal_self_attention.2} parent=47 // pred_region
        %p432 = scmp.lt.s32.totalorder %s23, 1
        %s433 = scalar_select %p432, %s23, 1
        %p434 = scmp.lt.s32.totalorder %s24, 0
        %s435 = scalar_select %p434, %s24, 0
        %s436 = sadd.s32 %s435, %s433
        %s437 = smul.addr %s436, 4
        %s438 = scalar_lea.vmem %s5, %s437
      $region60: #{causal_self_attention.2} parent=47 // pred_fallthru
        _
    $region48: #{causal_self_attention.2} parent=5 // pred_fallthru
      _
  $region6: #{causal_self_attention.2} parent=0 // loop_footer
    %s16 = sadd.s32 1, %s12
  $region7: #{causal_self_attention.2} parent=0 // loop_footer_branch
    %11 = sbr.rel target = $region3
  $region8: #{causal_self_attention.2} parent=0 // loop_exit
    _

// kernel: causal_self_attention.3
$region0: #{causal_self_attention.3}
  #allocation0 [shape = 'u32[]', space=smem, size = 0x4, offset = 0x4, fixed_abs, tag = 'smem constant byte address 0x4 - core index']
  #allocation1 [shape = 'u32[144,128]{1,0:T(1,128)}', space=vmem, size = 0x12000, scoped, tag = 'internal scratch']
  #allocation2 [shape = 'f32[4,8,1]{2,1,0:T(8,128)}', space=vmem, size = 0x4000, scoped, tag = 'scratch operand']
  #allocation3 [shape = 'f32[4,8,1]{2,1,0:T(8,128)}', space=vmem, size = 0x4000, scoped, tag = 'scratch operand']
  #allocation4 [shape = 'f32[4,8,8]{2,1,0:T(8,128)}', space=vmem, size = 0x4000, scoped, tag = 'scratch operand']
  #allocation5 [shape = 's32[1]{0}', space=sflag, size = 0x4, scoped, tag = 'scoped memory for causal_self_attention.3']
  #allocation6 [shape = 's32[1]{0:T(128)S(6)}', space=smem, size = 0x200, scoped, tag = 'prefetched SMEM operand 0']
  #allocation7 [shape = 's32[1]{0:T(128)S(6)}', space=smem, size = 0x200, scoped, tag = 'prefetched SMEM operand 1']
  %s0 = inlined_call_operand.<no memory space> [shape: s32[1], index: 0, kind: input, shape index: {}, may-alias: {0,1}]
  %s1 = inlined_call_operand.<no memory space> [shape: s32[1], index: 1, kind: input, shape index: {}, may-alias: {0,1}]
  %s2 = inlined_call_operand.vmem [shape: bf16[2,8,32], index: 2, kind: input, shape index: {}]
  %s3 = inlined_call_operand.vmem [shape: bf16[2,8,32], index: 3, kind: input, shape index: {}]
  %s4 = inlined_call_operand.vmem [shape: bf16[2,8,32], index: 4, kind: input, shape index: {}]
  %s5 = inlined_call_operand.vmem [shape: bf16[32,32], index: 5, kind: input, shape index: {}]
  %s6 = inlined_call_operand.vmem [shape: f32[1,32], index: 6, kind: input, shape index: {}]
  %s7 = inlined_call_operand.hbm [shape: f32[2,8,32], index: 7, kind: output, shape index: {}]
  %s8 = sld [smem:[#allocation0]]
  $region61: #{causal_self_attention.3} parent=0
    _
  %s10 = ssub.s32 1, %s8
  %s11 = scalar_select 0, %s10, %s8
  %12 = sst [smem:[#allocation6]] %s0
  %13 = sst [smem:[#allocation7]] %s1
  $region1: #{causal_self_attention.3} parent=0
    #allocation8 [shape = 'u8[8192]{0}', space=vmem, size = 0x2000, scoped, tag = 'output window, operand 0']
    #allocation9 [shape = 's32[2]{0}', space=sflag, size = 0x8, scoped, tag = 'scoped memory for causal_self_attention.3']
    %14 = vsyncpa [#allocation9], 0
    %s15 = scalar_lea.sflag [#allocation9], 1
    %16 = vsyncpa %s15, 0
    loop: start=0, step=1, limit=4
    $region2: #{causal_self_attention.3} parent=1 // loop_pre_header
      _
    $region3: #{causal_self_attention.3} parent=1 // loop_header
      %s18 = sphi 0, %s22
      %p19 = scmp.ge.s32.totalorder %s18, 4
      %s25 = sphi 0, %s37
      %s26 = sphi 0, %s33
      %s27 = sphi 0, %s25
      %s28 = sphi 0, %s26
      %s29 = sphi 0, %s27
      %s30 = sphi 0, %s28
      %s44 = sphi 0, %s46
      %s47 = sphi 0, %s44
      %s48 = sphi 0, %s47
      %s64 = sphi 0, %s48
      %s74 = sphi 0, %s76
      %s77 = sphi 0, %s74
      %s78 = sphi 0, %s77
      %s94 = sphi 0, %s78
      %s104 = sphi 0, %s106
      %s107 = sphi 0, %s104
      %s108 = sphi 0, %s107
      %s124 = sphi 0, %s108
      %s128 = sphi 0, %s128
      %s130 = sphi 0, %s128
      %s131 = sphi 0, %s130
      %s145 = sphi 0, %s131
      %s149 = sphi 0, %s149
      %s151 = sphi 0, %s149
      %s152 = sphi 0, %s151
      %s166 = sphi 0, %s152
      %s176 = sphi 0, %s178
      %s179 = sphi 0, %s176
      %s180 = sphi 0, %s179
      %s196 = sphi 0, %s180
    $region4: #{causal_self_attention.3} parent=1 // loop_header_branch
      %21 = sbr.rel (%p19) target = $region8
    $region5: #{causal_self_attention.3} parent=1 // loop_body
      %s23 = ssub.s32 %s18, 1
      %s24 = ssub.s32 %s18, 2
      %s31 = sadd.s32 1, %s26
      %p32 = scmp.ge.s32.totalorder %s31, 1
      %s33 = scalar_select %p32, 0, %s31
      %s34 = sadd.s32 1, %s25
      %s35 = scalar_select %p32, %s34, %s25
      %p36 = scmp.ge.s32.totalorder %s35, 2
      %s37 = scalar_select %p36, 0, %s35
      %s38 = sld [smem:[#allocation6 + %s26]]
      %s39 = sld [smem:[#allocation6 + %s33]]
      %s40 = ssub.s32 %s25, %s37
      %s41 = ssub.s32 %s38, %s39
      %s42 = sor.u32 %s40, %s41
      %p43 = scmp.eq.s32.totalorder %s42, 0
      %s45 = sadd.s32 %s44, 1
      %s46 = scalar_select %p43, %s44, %s45
      %p49 = pneg %p43
      %p50 = scmp.eq.s32.totalorder %s18, 1
      %p51 = por %p49, %p50
      %p52 = scmp.ne.s32.totalorder %s44, %s47
      %p53 = scmp.eq.s32.totalorder %s18, 0
      %p54 = por %p52, %p53
      %p55 = scmp.ne.s32.totalorder %s44, %s47
      %p56 = scmp.eq.s32.totalorder %s23, 1
      %p57 = por %p55, %p56
      %p58 = scmp.ne.s32.totalorder %s47, %s48
      %p59 = scmp.eq.s32.totalorder %s23, 0
      %p60 = por %p58, %p59
      %p61 = scmp.ne.s32.totalorder %s47, %s48
      %p62 = scmp.eq.s32.totalorder %s24, 1
      %p63 = por %p61, %p62
      %p65 = scmp.ne.s32.totalorder %s48, %s64
      %p66 = scmp.eq.s32.totalorder %s24, 0
      %p67 = por %p65, %p66
      %s68 = sld [smem:[#allocation7 + %s26]]
      %s69 = sld [smem:[#allocation7 + %s33]]
      %s70 = ssub.s32 %s25, %s37
      %s71 = ssub.s32 %s68, %s69
      %s72 = sor.u32 %s70, %s71
      %p73 = scmp.eq.s32.totalorder %s72, 0
      %s75 = sadd.s32 %s74, 1
      %s76 = scalar_select %p73, %s74, %s75
      %p79 = pneg %p73
      %p80 = scmp.eq.s32.totalorder %s18, 1
      %p81 = por %p79, %p80
      %p82 = scmp.ne.s32.totalorder %s74, %s77
      %p83 = scmp.eq.s32.totalorder %s18, 0
      %p84 = por %p82, %p83
      %p85 = scmp.ne.s32.totalorder %s74, %s77
      %p86 = scmp.eq.s32.totalorder %s23, 1
      %p87 = por %p85, %p86
      %p88 = scmp.ne.s32.totalorder %s77, %s78
      %p89 = scmp.eq.s32.totalorder %s23, 0
      %p90 = por %p88, %p89
      %p91 = scmp.ne.s32.totalorder %s77, %s78
      %p92 = scmp.eq.s32.totalorder %s24, 1
      %p93 = por %p91, %p92
      %p95 = scmp.ne.s32.totalorder %s78, %s94
      %p96 = scmp.eq.s32.totalorder %s24, 0
      %p97 = por %p95, %p96
      %s98 = sld [smem:[#allocation7 + %s26]]
      %s99 = sld [smem:[#allocation7 + %s33]]
      %s100 = ssub.s32 %s25, %s37
      %s101 = ssub.s32 %s98, %s99
      %s102 = sor.u32 %s100, %s101
      %p103 = scmp.eq.s32.totalorder %s102, 0
      %s105 = sadd.s32 %s104, 1
      %s106 = scalar_select %p103, %s104, %s105
      %p109 = pneg %p103
      %p110 = scmp.eq.s32.totalorder %s18, 1
      %p111 = por %p109, %p110
      %p112 = scmp.ne.s32.totalorder %s104, %s107
      %p113 = scmp.eq.s32.totalorder %s18, 0
      %p114 = por %p112, %p113
      %p115 = scmp.ne.s32.totalorder %s104, %s107
      %p116 = scmp.eq.s32.totalorder %s23, 1
      %p117 = por %p115, %p116
      %p118 = scmp.ne.s32.totalorder %s107, %s108
      %p119 = scmp.eq.s32.totalorder %s23, 0
      %p120 = por %p118, %p119
      %p121 = scmp.ne.s32.totalorder %s107, %s108
      %p122 = scmp.eq.s32.totalorder %s24, 1
      %p123 = por %p121, %p122
      %p125 = scmp.ne.s32.totalorder %s108, %s124
      %p126 = scmp.eq.s32.totalorder %s24, 0
      %p127 = por %p125, %p126
      %s129 = sadd.s32 %s128, 1
      %p132 = scmp.eq.s32.totalorder %s18, 1
      %p133 = scmp.ne.s32.totalorder %s128, %s130
      %p134 = scmp.eq.s32.totalorder %s18, 0
      %p135 = por %p133, %p134
      %p136 = scmp.ne.s32.totalorder %s128, %s130
      %p137 = scmp.eq.s32.totalorder %s23, 1
      %p138 = por %p136, %p137
      %p139 = scmp.ne.s32.totalorder %s130, %s131
      %p140 = scmp.eq.s32.totalorder %s23, 0
      %p141 = por %p139, %p140
      %p142 = scmp.ne.s32.totalorder %s130, %s131
      %p143 = scmp.eq.s32.totalorder %s24, 1
      %p144 = por %p142, %p143
      %p146 = scmp.ne.s32.totalorder %s131, %s145
      %p147 = scmp.eq.s32.totalorder %s24, 0
      %p148 = por %p146, %p147
      %s150 = sadd.s32 %s149, 1
      %p153 = scmp.eq.s32.totalorder %s18, 1
      %p154 = scmp.ne.s32.totalorder %s149, %s151
      %p155 = scmp.eq.s32.totalorder %s18, 0
      %p156 = por %p154, %p155
      %p157 = scmp.ne.s32.totalorder %s149, %s151
      %p158 = scmp.eq.s32.totalorder %s23, 1
      %p159 = por %p157, %p158
      %p160 = scmp.ne.s32.totalorder %s151, %s152
      %p161 = scmp.eq.s32.totalorder %s23, 0
      %p162 = por %p160, %p161
      %p163 = scmp.ne.s32.totalorder %s151, %s152
      %p164 = scmp.eq.s32.totalorder %s24, 1
      %p165 = por %p163, %p164
      %p167 = scmp.ne.s32.totalorder %s152, %s166
      %p168 = scmp.eq.s32.totalorder %s24, 0
      %p169 = por %p167, %p168
      %s170 = sld [smem:[#allocation6 + %s26]]
      %s171 = sld [smem:[#allocation6 + %s33]]
      %s172 = ssub.s32 %s25, %s37
      %s173 = ssub.s32 %s170, %s171
      %s174 = sor.u32 %s172, %s173
      %p175 = scmp.eq.s32.totalorder %s174, 0
      %s177 = sadd.s32 %s176, 1
      %s178 = scalar_select %p175, %s176, %s177
      %p181 = pneg %p175
      %p182 = scmp.eq.s32.totalorder %s18, 1
      %p183 = por %p181, %p182
      %p184 = scmp.ne.s32.totalorder %s176, %s179
      %p185 = scmp.eq.s32.totalorder %s18, 0
      %p186 = por %p184, %p185
      %p187 = scmp.ne.s32.totalorder %s176, %s179
      %p188 = scmp.eq.s32.totalorder %s23, 1
      %p189 = por %p187, %p188
      %p190 = scmp.ne.s32.totalorder %s179, %s180
      %p191 = scmp.eq.s32.totalorder %s23, 0
      %p192 = por %p190, %p191
      %p193 = scmp.ne.s32.totalorder %s179, %s180
      %p194 = scmp.eq.s32.totalorder %s24, 1
      %p195 = por %p193, %p194
      %p197 = scmp.ne.s32.totalorder %s180, %s196
      %p198 = scmp.eq.s32.totalorder %s24, 0
      %p199 = por %p197, %p198
      %p200 = scmp.le.s32.totalorder 1, %s18
      %p201 = scmp.lt.s32.totalorder %s18, 3
      %p202 = pnand %p200, %p201
      %p203 = pneg %p202
      // Predicated region
      $region9: #{causal_self_attention.3} parent=5 // pred_check
        _
      $region10: #{causal_self_attention.3} parent=5 // pred_check_branch
        %205 = sbr.rel (%p202) target = $region12
      $region11: #{causal_self_attention.3} parent=5 // pred_region
        %s206 = ssub.s32 %s18, 1
        // Predicated region
        $region13: #{causal_self_attention.3} parent=11 // pred_check
          %p207 = pneg %p141
        $region14: #{causal_self_attention.3} parent=11 // pred_check_branch
          %209 = sbr.rel (%p207) target = $region16
        $region15: #{causal_self_attention.3} parent=11 // pred_region
          _
        $region16: #{causal_self_attention.3} parent=11 // pred_fallthru
          _
        // Predicated region
        $region17: #{causal_self_attention.3} parent=11 // pred_check
          %p210 = pneg %p162
        $region18: #{causal_self_attention.3} parent=11 // pred_check_branch
          %212 = sbr.rel (%p210) target = $region20
        $region19: #{causal_self_attention.3} parent=11 // pred_region
          _
        $region20: #{causal_self_attention.3} parent=11 // pred_fallthru
          _
      $region12: #{causal_self_attention.3} parent=5 // pred_fallthru
        _
      %p213 = scmp.lt.s32.totalorder %s18, 2
      // Predicated region
      $region21: #{causal_self_attention.3} parent=5 // pred_check
        %p214 = pneg %p213
      $region22: #{causal_self_attention.3} parent=5 // pred_check_branch
        %216 = sbr.rel (%p214) target = $region24
      $region23: #{causal_self_attention.3} parent=5 // pred_region
        // Predicated region
        $region25: #{causal_self_attention.3} parent=23 // pred_check
          %p217 = pneg %p54
        $region26: #{causal_self_attention.3} parent=23 // pred_check_branch
          %219 = sbr.rel (%p217) target = $region28
        $region27: #{causal_self_attention.3} parent=23 // pred_region
          %s220 = sld [smem:[#allocation6 + %s26]]
          %p221 = scmp.lt.s32.totalorder %s25, 1
          %s222 = scalar_select %p221, %s25, 1
          %p223 = scmp.lt.s32.totalorder %s220, 0
          %s224 = scalar_select %p223, %s220, 0
          %s225 = sadd.s32 %s224, %s222
          %s226 = smul.addr %s225, 4
          %s227 = scalar_lea.vmem %s2, %s226
          %s228 = sld [smem:[#allocation6 + %s26]]
        $region28: #{causal_self_attention.3} parent=23 // pred_fallthru
          _
        // Predicated region
        $region29: #{causal_self_attention.3} parent=23 // pred_check
          %p229 = pneg %p84
        $region30: #{causal_self_attention.3} parent=23 // pred_check_branch
          %231 = sbr.rel (%p229) target = $region32
        $region31: #{causal_self_attention.3} parent=23 // pred_region
          %s232 = sld [smem:[#allocation7 + %s26]]
          %p233 = scmp.lt.s32.totalorder %s25, 1
          %s234 = scalar_select %p233, %s25, 1
          %p235 = scmp.lt.s32.totalorder %s232, 0
          %s236 = scalar_select %p235, %s232, 0
          %s237 = sadd.s32 %s236, %s234
          %s238 = smul.addr %s237, 4
          %s239 = scalar_lea.vmem %s3, %s238
          %s240 = sld [smem:[#allocation7 + %s26]]
        $region32: #{causal_self_attention.3} parent=23 // pred_fallthru
          _
        // Predicated region
        $region33: #{causal_self_attention.3} parent=23 // pred_check
          %p241 = pneg %p114
        $region34: #{causal_self_attention.3} parent=23 // pred_check_branch
          %243 = sbr.rel (%p241) target = $region36
        $region35: #{causal_self_attention.3} parent=23 // pred_region
          %s244 = sld [smem:[#allocation7 + %s26]]
          %p245 = scmp.lt.s32.totalorder %s25, 1
          %s246 = scalar_select %p245, %s25, 1
          %p247 = scmp.lt.s32.totalorder %s244, 0
          %s248 = scalar_select %p247, %s244, 0
          %s249 = sadd.s32 %s248, %s246
          %s250 = smul.addr %s249, 4
          %s251 = scalar_lea.vmem %s4, %s250
          %s252 = sld [smem:[#allocation7 + %s26]]
        $region36: #{causal_self_attention.3} parent=23 // pred_fallthru
          _
      $region24: #{causal_self_attention.3} parent=5 // pred_fallthru
        _
      %p253 = scmp.le.s32.totalorder 1, %s18
      %p254 = scmp.lt.s32.totalorder %s18, 3
      %p255 = pnand %p253, %p254
      %p256 = pneg %p255
      // Predicated region
      $region37: #{causal_self_attention.3} parent=5 // pred_check
        _
      $region38: #{causal_self_attention.3} parent=5 // pred_check_branch
        %258 = sbr.rel (%p255) target = $region40
      $region39: #{causal_self_attention.3} parent=5 // pred_region
        %s259 = ssub.s32 %s18, 1
        %s260 = sld [smem:[#allocation6 + %s28]]
        %p261 = scmp.lt.s32.totalorder %s27, 1
        %s262 = scalar_select %p261, %s27, 1
        %p263 = scmp.lt.s32.totalorder %s260, 0
        %s264 = scalar_select %p263, %s260, 0
        %s265 = sadd.s32 %s264, %s262
        %s266 = smul.addr %s265, 4
        %s267 = scalar_lea.vmem %s2, %s266
        %p268 = pneg %p60
        %p269 = pneg %p57
        %s270 = sld [smem:[#allocation7 + %s28]]
        %p271 = scmp.lt.s32.totalorder %s27, 1
        %s272 = scalar_select %p271, %s27, 1
        %p273 = scmp.lt.s32.totalorder %s270, 0
        %s274 = scalar_select %p273, %s270, 0
        %s275 = sadd.s32 %s274, %s272
        %s276 = smul.addr %s275, 4
        %s277 = scalar_lea.vmem %s3, %s276
        %p278 = pneg %p90
        %p279 = pneg %p87
        %s280 = sld [smem:[#allocation7 + %s28]]
        %p281 = scmp.lt.s32.totalorder %s27, 1
        %s282 = scalar_select %p281, %s27, 1
        %p283 = scmp.lt.s32.totalorder %s280, 0
        %s284 = scalar_select %p283, %s280, 0
        %s285 = sadd.s32 %s284, %s282
        %s286 = smul.addr %s285, 4
        %s287 = scalar_lea.vmem %s4, %s286
        %p288 = pneg %p120
        %p289 = pneg %p117
        %p290 = pneg %p141
        %p291 = pneg %p138
        %p292 = pneg %p162
        %p293 = pneg %p159
        %p294 = pneg %p192
        %p295 = pneg %p189
        %s296 = sand.u32 %s179, 1
        %s297 = scalar_lea.sflag [#allocation9], %s296
        %s298 = sand.u32 %s179, 1
        %s299 = smul.addr %s298, 8
        %s300 = scalar_lea.vmem [#allocation8], %s299
        %s301 = sld [smem:[#allocation6 + %s28]]
        %p302 = scmp.lt.s32.totalorder %s27, 1
        %s303 = scalar_select %p302, %s27, 1
        %p304 = scmp.lt.s32.totalorder %s301, 0
        %s305 = scalar_select %p304, %s301, 0
        %s306 = sadd.s32 %s305, %s303
        %s307 = smul.addr %s306, 4
        %s308 = scalar_lea.vmem %s2, %s307
        %s309 = sld [smem:[#allocation6 + %s28]]
        %s310 = sld [smem:[#allocation7 + %s28]]
        %p311 = scmp.lt.s32.totalorder %s27, 1
        %s312 = scalar_select %p311, %s27, 1
        %p313 = scmp.lt.s32.totalorder %s310, 0
        %s314 = scalar_select %p313, %s310, 0
        %s315 = sadd.s32 %s314, %s312
        %s316 = smul.addr %s315, 4
        %s317 = scalar_lea.vmem %s3, %s316
        %s318 = sld [smem:[#allocation7 + %s28]]
        %s319 = sld [smem:[#allocation7 + %s28]]
        %p320 = scmp.lt.s32.totalorder %s27, 1
        %s321 = scalar_select %p320, %s27, 1
        %p322 = scmp.lt.s32.totalorder %s319, 0
        %s323 = scalar_select %p322, %s319, 0
        %s324 = sadd.s32 %s323, %s321
        %s325 = smul.addr %s324, 4
        %s326 = scalar_lea.vmem %s4, %s325
        %s327 = sld [smem:[#allocation7 + %s28]]
        %s328 = sld [smem:[#allocation6 + %s28]]
        %s330 = sld [smem:[#allocation6 + %s28]]
        %s331 = sld [smem:[#allocation7 + %s28]]
        %p332 = scmp.eq.s32.totalorder %s331, 0
        // Predicated region
        $region41: #{causal_self_attention.3} parent=39 // pred_check
          %p333 = pneg %p332
        $region42: #{causal_self_attention.3} parent=39 // pred_check_branch
          %335 = sbr.rel (%p333) target = $region44
        $region43: #{causal_self_attention.3} parent=39 // pred_region
          %vm336 = vcmask 7168
          %337 = vst.msk [vmem:[#allocation2] sm:$0xff] %vm336, -1e+30
          %338 = vst.msk [vmem:[#allocation2 + $0x8] sm:$0xff] %vm336, -1e+30
          %339 = vst.msk [vmem:[#allocation2 + $0x10] sm:$0xff] %vm336, -1e+30
          %340 = vst.msk [vmem:[#allocation2 + $0x18] sm:$0xff] %vm336, -1e+30
          %341 = vst.msk [vmem:[#allocation3] sm:$0xff] %vm336, 0.0
          %342 = vst.msk [vmem:[#allocation3 + $0x8] sm:$0xff] %vm336, 0.0
          %343 = vst.msk [vmem:[#allocation3 + $0x10] sm:$0xff] %vm336, 0.0
          %344 = vst.msk [vmem:[#allocation3 + $0x18] sm:$0xff] %vm336, 0.0
          %vm345 = vcmask 64512
          %346 = vst.msk [vmem:[#allocation4] sm:$0xff] %vm345, 0.0
          %347 = vst.msk [vmem:[#allocation4 + $0x8] sm:$0xff] %vm345, 0.0
          %348 = vst.msk [vmem:[#allocation4 + $0x10] sm:$0xff] %vm345, 0.0
          %349 = vst.msk [vmem:[#allocation4 + $0x18] sm:$0xff] %vm345, 0.0
        $region44: #{causal_self_attention.3} parent=39 // pred_fallthru
          _
        %v350 = vld [vmem:[%s308] sm:$0xf]
        %v351 = vld [vmem:[%s317] sm:$0xf]
        %v352 = vld [vmem:[%s326] sm:$0xf]
        %v353 = vlaneseq
        %v354 = vshrl.u32 %v353, 7
        %v355 = vlaneseq
        %v356 = vand.u32 %v355, 127
        %p357 = scmp.eq.s32.totalorder %s331, %s330
        %vm358 = vcmp.lt.s32.totalorder %v354, %v356
        %s359 = scalar_select %p357, 1, 0
        %v360 = vstv %s359
        %vm361 = vcmp.eq.s32.totalorder %v360, 1
        %vm362 = vmand %vm361, %vm358
        %v363 = vsel %vm362, -1e+30, 0.0
        %vm364 = vcmask 64512
        %v366 = vsel %vm364, %v350, 0
        %v369 = vsel %vm364, %v351, 0
        %371 = vmatprep.subr.bf16.mxu0 0
        %372 = vmatpush1.bf16.xpose.msra.mxu0 %v369
        %373 = vmatprep.subr.bf16.mxu0 0
        %374 = vmatpush1.bf16.xpose.msra.mxu0 0
        %375 = vmatprep.subr.bf16.mxu0 0
        %376 = vmatpush1.bf16.xpose.msra.mxu0 0
        %377 = vmatprep.subr.bf16.mxu0 0
        %378 = vmatpush1.bf16.xpose.msra.mxu0 0
        %379 = vmatprep.subr.bf16.mxu0 0
        %380 = vmatpush1.bf16.xpose.msra.mxu0 0
        %381 = vmatprep.subr.bf16.mxu0 0
        %382 = vmatpush1.bf16.xpose.msra.mxu0 0
        %383 = vmatprep.subr.bf16.mxu0 0
        %384 = vmatpush1.bf16.xpose.msra.mxu0 0
        %385 = vmatprep.subr.bf16.mxu0 0
        %386 = vmatpush1.bf16.xpose.msra.mxu0 0
        %387 = vmatprep.subr.bf16.mxu0 0
        %388 = vmatpush1.bf16.xpose.msra.mxu0 0
        %389 = vmatprep.subr.bf16.mxu0 0
        %390 = vmatpush1.bf16.xpose.msra.mxu0 0
        %391 = vmatprep.subr.bf16.mxu0 0
        %392 = vmatpush1.bf16.xpose.msra.mxu0 0
        %393 = vmatprep.subr.bf16.mxu0 0
        %394 = vmatpush1.bf16.xpose.msra.mxu0 0
        %395 = vmatprep.subr.bf16.mxu0 0
        %396 = vmatpush1.bf16.xpose.msra.mxu0 0
        %397 = vmatprep.subr.bf16.mxu0 0
        %398 = vmatpush1.bf16.xpose.msra.mxu0 0
        %399 = vmatprep.subr.bf16.mxu0 0
        %400 = vmatpush1.bf16.xpose.msra.mxu0 0
        %401 = vmatprep.subr.bf16.mxu0 0
        %402 = vmatpush1.bf16.xpose.msra.mxu0 0
        %403 = vmatprep.mubr.bf16.mxu0 0
        %404 = vmatmul.mubr.bf16.gmra.mrb[0].mxu0 %v366
        %v405 = vpop.f32.mrb[0].mxu0
        %v406 = vadd.f32 %v363, %v405
        %v407 = vpop.f32.mrb[0].mxu0
        %v408 = vpop.f32.mrb[0].mxu0
        %v409 = vpop.f32.mrb[0].mxu0
        %410 = vdwg.mxu0
        %v411 = vld [vmem:[#allocation2] sm:$0xff]
        %v412 = vsel %vm364, %v406, -inf
        %413 = vmax.xlane.f32.xlu0 %v412
        %v414 = vpop.xlane.xlu0 %413
        %v415 = vmax.f32 %v411, %v414
        %v416 = vsub.f32 %v411, %v415
        %v417 = vmul.f32 %v416, 1.442695
        %v418 = vpow.pop %v417
        %420 = vset.pattern.permute.xlu0 0
        %421 = vperm.xlu0 %420, %v415
        %v422 = vpop.permute.xlu0 %421
        %v424 = vsub.f32 %v406, %v422
        %v425 = vmul.f32 %v424, 1.442695
        %v426 = vpow.pop %v425
        %v427 = vpack.c.bf16 %v426, %v426
        %v428 = vsel %vm364, %v426, 0.0
        %429 = vadd.xlane.f32.xlu0 %v428
        %v430 = vpop.xlane.xlu0 %429
        %v431 = vld [vmem:[#allocation3] sm:$0xff]
        %v432 = vmul.f32 %v418, %v431
        %v433 = vadd.f32 %v432, %v430
        %vm434 = vcmask 7168
        %435 = vst.msk [vmem:[#allocation3] sm:$0xff] %vm434, %v433
        %v436 = vld [vmem:[#allocation4] sm:$0xff]
        %438 = vset.pattern.permute.xlu0 0
        %439 = vperm.xlu0 %438, %v418
        %v440 = vpop.permute.xlu0 %439
        %v442 = vmul.f32 %v440, %v436
        %v444 = vsel %vm364, %v427, 0
        %vm446 = vcmask 1043456
        %v448 = vsel %vm446, %v352, 0
        %450 = vmatprep.subr.bf16.mxu0 0
        %451 = vmatpush1.bf16.msra.mxu0 %v448
        %452 = vmatprep.subr.bf16.mxu0 0
        %453 = vmatpush1.bf16.msra.mxu0 0
        %454 = vmatprep.subr.bf16.mxu0 0
        %455 = vmatpush1.bf16.msra.mxu0 0
        %456 = vmatprep.subr.bf16.mxu0 0
        %457 = vmatpush1.bf16.msra.mxu0 0
        %458 = vmatprep.subr.bf16.mxu0 0
        %459 = vmatpush1.bf16.msra.mxu0 0
        %460 = vmatprep.subr.bf16.mxu0 0
        %461 = vmatpush1.bf16.msra.mxu0 0
        %462 = vmatprep.subr.bf16.mxu0 0
        %463 = vmatpush1.bf16.msra.mxu0 0
        %464 = vmatprep.subr.bf16.mxu0 0
        %465 = vmatpush1.bf16.msra.mxu0 0
        %466 = vmatprep.subr.bf16.mxu0 0
        %467 = vmatpush1.bf16.msra.mxu0 0
        %468 = vmatprep.subr.bf16.mxu0 0
        %469 = vmatpush1.bf16.msra.mxu0 0
        %470 = vmatprep.subr.bf16.mxu0 0
        %471 = vmatpush1.bf16.msra.mxu0 0
        %472 = vmatprep.subr.bf16.mxu0 0
        %473 = vmatpush1.bf16.msra.mxu0 0
        %474 = vmatprep.subr.bf16.mxu0 0
        %475 = vmatpush1.bf16.msra.mxu0 0
        %476 = vmatprep.subr.bf16.mxu0 0
        %477 = vmatpush1.bf16.msra.mxu0 0
        %478 = vmatprep.subr.bf16.mxu0 0
        %479 = vmatpush1.bf16.msra.mxu0 0
        %480 = vmatprep.subr.bf16.mxu0 0
        %481 = vmatpush1.bf16.msra.mxu0 0
        %482 = vmatprep.mubr.bf16.mxu0 0
        %483 = vmatmul.mubr.bf16.gmra.mrb[0].mxu0 %v444
        %v484 = vpop.f32.mrb[0].mxu0
        %v485 = vadd.f32 0.0, %v484
        %v486 = vpop.f32.mrb[0].mxu0
        %v487 = vpop.f32.mrb[0].mxu0
        %v488 = vpop.f32.mrb[0].mxu0
        %489 = vdwg.mxu0
        %v490 = vadd.f32 %v442, %v485
        %491 = vst.msk [vmem:[#allocation4] sm:$0xff] %vm364, %v490
        %492 = vst.msk [vmem:[#allocation2] sm:$0xff] %vm434, %v415
        %v494 = vunpack.c.l.b16 %v350
        %v495 = vpack.c.b16 %v494, %v494
        %496 = vrot.lane.b32.xlu0 %v495, 120
        %v497 = vpop.permute.xlu0 %496
        %v499 = vunpack.c.l.b16 %v351
        %v500 = vpack.c.b16 %v499, %v499
        %501 = vrot.lane.b32.xlu0 %v500, 120
        %v502 = vpop.permute.xlu0 %501
        %v504 = vsel %vm364, %v497, 0
        %v507 = vsel %vm364, %v502, 0
        %509 = vmatprep.subr.bf16.mxu0 0
        %510 = vmatpush1.bf16.xpose.msra.mxu0 %v507
        %511 = vmatprep.subr.bf16.mxu0 0
        %512 = vmatpush1.bf16.xpose.msra.mxu0 0
        %513 = vmatprep.subr.bf16.mxu0 0
        %514 = vmatpush1.bf16.xpose.msra.mxu0 0
        %515 = vmatprep.subr.bf16.mxu0 0
        %516 = vmatpush1.bf16.xpose.msra.mxu0 0
        %517 = vmatprep.subr.bf16.mxu0 0
        %518 = vmatpush1.bf16.xpose.msra.mxu0 0
        %519 = vmatprep.subr.bf16.mxu0 0
        %520 = vmatpush1.bf16.xpose.msra.mxu0 0
        %521 = vmatprep.subr.bf16.mxu0 0
        %522 = vmatpush1.bf16.xpose.msra.mxu0 0
        %523 = vmatprep.subr.bf16.mxu0 0
        %524 = vmatpush1.bf16.xpose.msra.mxu0 0
        %525 = vmatprep.subr.bf16.mxu0 0
        %526 = vmatpush1.bf16.xpose.msra.mxu0 0
        %527 = vmatprep.subr.bf16.mxu0 0
        %528 = vmatpush1.bf16.xpose.msra.mxu0 0
        %529 = vmatprep.subr.bf16.mxu0 0
        %530 = vmatpush1.bf16.xpose.msra.mxu0 0
        %531 = vmatprep.subr.bf16.mxu0 0
        %532 = vmatpush1.bf16.xpose.msra.mxu0 0
        %533 = vmatprep.subr.bf16.mxu0 0
        %534 = vmatpush1.bf16.xpose.msra.mxu0 0
        %535 = vmatprep.subr.bf16.mxu0 0
        %536 = vmatpush1.bf16.xpose.msra.mxu0 0
        %537 = vmatprep.subr.bf16.mxu0 0
        %538 = vmatpush1.bf16.xpose.msra.mxu0 0
        %539 = vmatprep.subr.bf16.mxu0 0
        %540 = vmatpush1.bf16.xpose.msra.mxu0 0
        %541 = vmatprep.mubr.bf16.mxu0 0
        %542 = vmatmul.mubr.bf16.gmra.mrb[0].mxu0 %v504
        %v543 = vpop.f32.mrb[0].mxu0
        %v544 = vadd.f32 %v363, %v543
        %v545 = vpop.f32.mrb[0].mxu0
        %v546 = vpop.f32.mrb[0].mxu0
        %v547 = vpop.f32.mrb[0].mxu0
        %548 = vdwg.mxu0
        %s549 = scalar_lea.vmem [#allocation2], 8
        %v550 = vld [vmem:[%s549] sm:$0xff]
        %v551 = vsel %vm364, %v544, -inf
        %552 = vmax.xlane.f32.xlu0 %v551
        %v553 = vpop.xlane.xlu0 %552
        %v554 = vmax.f32 %v550, %v553
        %v555 = vsub.f32 %v550, %v554
        %v556 = vmul.f32 %v555, 1.442695
        %v557 = vpow.pop %v556
        %559 = vset.pattern.permute.xlu0 0
        %560 = vperm.xlu0 %559, %v554
        %v561 = vpop.permute.xlu0 %560
        %v563 = vsub.f32 %v544, %v561
        %v564 = vmul.f32 %v563, 1.442695
        %v565 = vpow.pop %v564
        %v566 = vpack.c.bf16 %v565, %v565
        %v567 = vsel %vm364, %v565, 0.0
        %568 = vadd.xlane.f32.xlu0 %v567
        %v569 = vpop.xlane.xlu0 %568
        %s570 = scalar_lea.vmem [#allocation3], 8
        %v571 = vld [vmem:[%s570] sm:$0xff]
        %v572 = vmul.f32 %v557, %v571
        %v573 = vadd.f32 %v572, %v569
        %574 = vst.msk [vmem:[%s570] sm:$0xff] %vm434, %v573
        %s575 = scalar_lea.vmem [#allocation4], 8
        %v576 = vld [vmem:[%s575] sm:$0xff]
        %578 = vset.pattern.permute.xlu0 0
        %579 = vperm.xlu0 %578, %v557
        %v580 = vpop.permute.xlu0 %579
        %v582 = vmul.f32 %v580, %v576
        %v584 = vunpack.c.l.b16 %v352
        %v585 = vpack.c.b16 %v584, %v584
        %586 = vrot.lane.b32.xlu0 %v585, 120
        %v587 = vpop.permute.xlu0 %586
        %v589 = vsel %vm364, %v566, 0
        %v592 = vsel %vm446, %v587, 0
        %594 = vmatprep.subr.bf16.mxu0 0
        %595 = vmatpush1.bf16.msra.mxu0 %v592
        %596 = vmatprep.subr.bf16.mxu0 0
        %597 = vmatpush1.bf16.msra.mxu0 0
        %598 = vmatprep.subr.bf16.mxu0 0
        %599 = vmatpush1.bf16.msra.mxu0 0
        %600 = vmatprep.subr.bf16.mxu0 0
        %601 = vmatpush1.bf16.msra.mxu0 0
        %602 = vmatprep.subr.bf16.mxu0 0
        %603 = vmatpush1.bf16.msra.mxu0 0
        %604 = vmatprep.subr.bf16.mxu0 0
        %605 = vmatpush1.bf16.msra.mxu0 0
        %606 = vmatprep.subr.bf16.mxu0 0
        %607 = vmatpush1.bf16.msra.mxu0 0
        %608 = vmatprep.subr.bf16.mxu0 0
        %609 = vmatpush1.bf16.msra.mxu0 0
        %610 = vmatprep.subr.bf16.mxu0 0
        %611 = vmatpush1.bf16.msra.mxu0 0
        %612 = vmatprep.subr.bf16.mxu0 0
        %613 = vmatpush1.bf16.msra.mxu0 0
        %614 = vmatprep.subr.bf16.mxu0 0
        %615 = vmatpush1.bf16.msra.mxu0 0
        %616 = vmatprep.subr.bf16.mxu0 0
        %617 = vmatpush1.bf16.msra.mxu0 0
        %618 = vmatprep.subr.bf16.mxu0 0
        %619 = vmatpush1.bf16.msra.mxu0 0
        %620 = vmatprep.subr.bf16.mxu0 0
        %621 = vmatpush1.bf16.msra.mxu0 0
        %622 = vmatprep.subr.bf16.mxu0 0
        %623 = vmatpush1.bf16.msra.mxu0 0
        %624 = vmatprep.subr.bf16.mxu0 0
        %625 = vmatpush1.bf16.msra.mxu0 0
        %626 = vmatprep.mubr.bf16.mxu0 0
        %627 = vmatmul.mubr.bf16.gmra.mrb[0].mxu0 %v589
        %v628 = vpop.f32.mrb[0].mxu0
        %v629 = vadd.f32 0.0, %v628
        %v630 = vpop.f32.mrb[0].mxu0
        %v631 = vpop.f32.mrb[0].mxu0
        %v632 = vpop.f32.mrb[0].mxu0
        %633 = vdwg.mxu0
        %v634 = vadd.f32 %v582, %v629
        %635 = vst.msk [vmem:[%s575] sm:$0xff] %vm364, %v634
        %636 = vst.msk [vmem:[%s549] sm:$0xff] %vm434, %v554
        %637 = vrot.lane.b32.xlu0 %v495, 112
        %v638 = vpop.permute.xlu0 %637
        %639 = vrot.lane.b32.xlu0 %v500, 112
        %v640 = vpop.permute.xlu0 %639
        %v642 = vsel %vm364, %v638, 0
        %v645 = vsel %vm364, %v640, 0
        %647 = vmatprep.subr.bf16.mxu0 0
        %648 = vmatpush1.bf16.xpose.msra.mxu0 %v645
        %649 = vmatprep.subr.bf16.mxu0 0
        %650 = vmatpush1.bf16.xpose.msra.mxu0 0
        %651 = vmatprep.subr.bf16.mxu0 0
        %652 = vmatpush1.bf16.xpose.msra.mxu0 0
        %653 = vmatprep.subr.bf16.mxu0 0
        %654 = vmatpush1.bf16.xpose.msra.mxu0 0
        %655 = vmatprep.subr.bf16.mxu0 0
        %656 = vmatpush1.bf16.xpose.msra.mxu0 0
        %657 = vmatprep.subr.bf16.mxu0 0
        %658 = vmatpush1.bf16.xpose.msra.mxu0 0
        %659 = vmatprep.subr.bf16.mxu0 0
        %660 = vmatpush1.bf16.xpose.msra.mxu0 0
        %661 = vmatprep.subr.bf16.mxu0 0
        %662 = vmatpush1.bf16.xpose.msra.mxu0 0
        %663 = vmatprep.subr.bf16.mxu0 0
        %664 = vmatpush1.bf16.xpose.msra.mxu0 0
        %665 = vmatprep.subr.bf16.mxu0 0
        %666 = vmatpush1.bf16.xpose.msra.mxu0 0
        %667 = vmatprep.subr.bf16.mxu0 0
        %668 = vmatpush1.bf16.xpose.msra.mxu0 0
        %669 = vmatprep.subr.bf16.mxu0 0
        %670 = vmatpush1.bf16.xpose.msra.mxu0 0
        %671 = vmatprep.subr.bf16.mxu0 0
        %672 = vmatpush1.bf16.xpose.msra.mxu0 0
        %673 = vmatprep.subr.bf16.mxu0 0
        %674 = vmatpush1.bf16.xpose.msra.mxu0 0
        %675 = vmatprep.subr.bf16.mxu0 0
        %676 = vmatpush1.bf16.xpose.msra.mxu0 0
        %677 = vmatprep.subr.bf16.mxu0 0
        %678 = vmatpush1.bf16.xpose.msra.mxu0 0
        %679 = vmatprep.mubr.bf16.mxu0 0
        %680 = vmatmul.mubr.bf16.gmra.mrb[0].mxu0 %v642
        %v681 = vpop.f32.mrb[0].mxu0
        %v682 = vadd.f32 %v363, %v681
        %v683 = vpop.f32.mrb[0].mxu0
        %v684 = vpop.f32.mrb[0].mxu0
        %v685 = vpop.f32.mrb[0].mxu0
        %686 = vdwg.mxu0
        %s687 = scalar_lea.vmem [#allocation2], 16
        %v688 = vld [vmem:[%s687] sm:$0xff]
        %v689 = vsel %vm364, %v682, -inf
        %690 = vmax.xlane.f32.xlu0 %v689
        %v691 = vpop.xlane.xlu0 %690
        %v692 = vmax.f32 %v688, %v691
        %v693 = vsub.f32 %v688, %v692
        %v694 = vmul.f32 %v693, 1.442695
        %v695 = vpow.pop %v694
        %697 = vset.pattern.permute.xlu0 0
        %698 = vperm.xlu0 %697, %v692
        %v699 = vpop.permute.xlu0 %698
        %v701 = vsub.f32 %v682, %v699
        %v702 = vmul.f32 %v701, 1.442695
        %v703 = vpow.pop %v702
        %v704 = vpack.c.bf16 %v703, %v703
        %v705 = vsel %vm364, %v703, 0.0
        %706 = vadd.xlane.f32.xlu0 %v705
        %v707 = vpop.xlane.xlu0 %706
        %s708 = scalar_lea.vmem [#allocation3], 16
        %v709 = vld [vmem:[%s708] sm:$0xff]
        %v710 = vmul.f32 %v695, %v709
        %v711 = vadd.f32 %v710, %v707
        %712 = vst.msk [vmem:[%s708] sm:$0xff] %vm434, %v711
        %s713 = scalar_lea.vmem [#allocation4], 16
        %v714 = vld [vmem:[%s713] sm:$0xff]
        %716 = vset.pattern.permute.xlu0 0
        %717 = vperm.xlu0 %716, %v695
        %v718 = vpop.permute.xlu0 %717
        %v720 = vmul.f32 %v718, %v714
        %721 = vrot.lane.b32.xlu0 %v585, 112
        %v722 = vpop.permute.xlu0 %721
        %v724 = vsel %vm364, %v704, 0
        %v727 = vsel %vm446, %v722, 0
        %729 = vmatprep.subr.bf16.mxu0 0
        %730 = vmatpush1.bf16.msra.mxu0 %v727
        %731 = vmatprep.subr.bf16.mxu0 0
        %732 = vmatpush1.bf16.msra.mxu0 0
        %733 = vmatprep.subr.bf16.mxu0 0
        %734 = vmatpush1.bf16.msra.mxu0 0
        %735 = vmatprep.subr.bf16.mxu0 0
        %736 = vmatpush1.bf16.msra.mxu0 0
        %737 = vmatprep.subr.bf16.mxu0 0
        %738 = vmatpush1.bf16.msra.mxu0 0
        %739 = vmatprep.subr.bf16.mxu0 0
        %740 = vmatpush1.bf16.msra.mxu0 0
        %741 = vmatprep.subr.bf16.mxu0 0
        %742 = vmatpush1.bf16.msra.mxu0 0
        %743 = vmatprep.subr.bf16.mxu0 0
        %744 = vmatpush1.bf16.msra.mxu0 0
        %745 = vmatprep.subr.bf16.mxu0 0
        %746 = vmatpush1.bf16.msra.mxu0 0
        %747 = vmatprep.subr.bf16.mxu0 0
        %748 = vmatpush1.bf16.msra.mxu0 0
        %749 = vmatprep.subr.bf16.mxu0 0
        %750 = vmatpush1.bf16.msra.mxu0 0
        %751 = vmatprep.subr.bf16.mxu0 0
        %752 = vmatpush1.bf16.msra.mxu0 0
        %753 = vmatprep.subr.bf16.mxu0 0
        %754 = vmatpush1.bf16.msra.mxu0 0
        %755 = vmatprep.subr.bf16.mxu0 0
        %756 = vmatpush1.bf16.msra.mxu0 0
        %757 = vmatprep.subr.bf16.mxu0 0
        %758 = vmatpush1.bf16.msra.mxu0 0
        %759 = vmatprep.subr.bf16.mxu0 0
        %760 = vmatpush1.bf16.msra.mxu0 0
        %761 = vmatprep.mubr.bf16.mxu0 0
        %762 = vmatmul.mubr.bf16.gmra.mrb[0].mxu0 %v724
        %v763 = vpop.f32.mrb[0].mxu0
        %v764 = vadd.f32 0.0, %v763
        %v765 = vpop.f32.mrb[0].mxu0
        %v766 = vpop.f32.mrb[0].mxu0
        %v767 = vpop.f32.mrb[0].mxu0
        %768 = vdwg.mxu0
        %v769 = vadd.f32 %v720, %v764
        %770 = vst.msk [vmem:[%s713] sm:$0xff] %vm364, %v769
        %771 = vst.msk [vmem:[%s687] sm:$0xff] %vm434, %v692
        %772 = vrot.lane.b32.xlu0 %v495, 104
        %v773 = vpop.permute.xlu0 %772
        %774 = vrot.lane.b32.xlu0 %v500, 104
        %v775 = vpop.permute.xlu0 %774
        %v777 = vsel %vm364, %v773, 0
        %v780 = vsel %vm364, %v775, 0
        %782 = vmatprep.subr.bf16.mxu0 0
        %783 = vmatpush1.bf16.xpose.msra.mxu0 %v780
        %784 = vmatprep.subr.bf16.mxu0 0
        %785 = vmatpush1.bf16.xpose.msra.mxu0 0
        %786 = vmatprep.subr.bf16.mxu0 0
        %787 = vmatpush1.bf16.xpose.msra.mxu0 0
        %788 = vmatprep.subr.bf16.mxu0 0
        %789 = vmatpush1.bf16.xpose.msra.mxu0 0
        %790 = vmatprep.subr.bf16.mxu0 0
        %791 = vmatpush1.bf16.xpose.msra.mxu0 0
        %792 = vmatprep.subr.bf16.mxu0 0
        %793 = vmatpush1.bf16.xpose.msra.mxu0 0
        %794 = vmatprep.subr.bf16.mxu0 0
        %795 = vmatpush1.bf16.xpose.msra.mxu0 0
        %796 = vmatprep.subr.bf16.mxu0 0
        %797 = vmatpush1.bf16.xpose.msra.mxu0 0
        %798 = vmatprep.subr.bf16.mxu0 0
        %799 = vmatpush1.bf16.xpose.msra.mxu0 0
        %800 = vmatprep.subr.bf16.mxu0 0
        %801 = vmatpush1.bf16.xpose.msra.mxu0 0
        %802 = vmatprep.subr.bf16.mxu0 0
        %803 = vmatpush1.bf16.xpose.msra.mxu0 0
        %804 = vmatprep.subr.bf16.mxu0 0
        %805 = vmatpush1.bf16.xpose.msra.mxu0 0
        %806 = vmatprep.subr.bf16.mxu0 0
        %807 = vmatpush1.bf16.xpose.msra.mxu0 0
        %808 = vmatprep.subr.bf16.mxu0 0
        %809 = vmatpush1.bf16.xpose.msra.mxu0 0
        %810 = vmatprep.subr.bf16.mxu0 0
        %811 = vmatpush1.bf16.xpose.msra.mxu0 0
        %812 = vmatprep.subr.bf16.mxu0 0
        %813 = vmatpush1.bf16.xpose.msra.mxu0 0
        %814 = vmatprep.mubr.bf16.mxu0 0
        %815 = vmatmul.mubr.bf16.gmra.mrb[0].mxu0 %v777
        %v816 = vpop.f32.mrb[0].mxu0
        %v817 = vadd.f32 %v363, %v816
        %v818 = vpop.f32.mrb[0].mxu0
        %v819 = vpop.f32.mrb[0].mxu0
        %v820 = vpop.f32.mrb[0].mxu0
        %821 = vdwg.mxu0
        %s822 = scalar_lea.vmem [#allocation2], 24
        %v823 = vld [vmem:[%s822] sm:$0xff]
        %v824 = vsel %vm364, %v817, -inf
        %825 = vmax.xlane.f32.xlu0 %v824
        %v826 = vpop.xlane.xlu0 %825
        %v827 = vmax.f32 %v823, %v826
        %v828 = vsub.f32 %v823, %v827
        %v829 = vmul.f32 %v828, 1.442695
        %v830 = vpow.pop %v829
        %832 = vset.pattern.permute.xlu0 0
        %833 = vperm.xlu0 %832, %v827
        %v834 = vpop.permute.xlu0 %833
        %v836 = vsub.f32 %v817, %v834
        %v837 = vmul.f32 %v836, 1.442695
        %v838 = vpow.pop %v837
        %v839 = vpack.c.bf16 %v838, %v838
        %v840 = vsel %vm364, %v838, 0.0
        %841 = vadd.xlane.f32.xlu0 %v840
        %v842 = vpop.xlane.xlu0 %841
        %s843 = scalar_lea.vmem [#allocation3], 24
        %v844 = vld [vmem:[%s843] sm:$0xff]
        %v845 = vmul.f32 %v830, %v844
        %v846 = vadd.f32 %v845, %v842
        %847 = vst.msk [vmem:[%s843] sm:$0xff] %vm434, %v846
        %s848 = scalar_lea.vmem [#allocation4], 24
        %v849 = vld [vmem:[%s848] sm:$0xff]
        %851 = vset.pattern.permute.xlu0 0
        %852 = vperm.xlu0 %851, %v830
        %v853 = vpop.permute.xlu0 %852
        %v855 = vmul.f32 %v853, %v849
        %856 = vrot.lane.b32.xlu0 %v585, 104
        %v857 = vpop.permute.xlu0 %856
        %v859 = vsel %vm364, %v839, 0
        %v862 = vsel %vm446, %v857, 0
        %864 = vmatprep.subr.bf16.mxu0 0
        %865 = vmatpush1.bf16.msra.mxu0 %v862
        %866 = vmatprep.subr.bf16.mxu0 0
        %867 = vmatpush1.bf16.msra.mxu0 0
        %868 = vmatprep.subr.bf16.mxu0 0
        %869 = vmatpush1.bf16.msra.mxu0 0
        %870 = vmatprep.subr.bf16.mxu0 0
        %871 = vmatpush1.bf16.msra.mxu0 0
        %872 = vmatprep.subr.bf16.mxu0 0
        %873 = vmatpush1.bf16.msra.mxu0 0
        %874 = vmatprep.subr.bf16.mxu0 0
        %875 = vmatpush1.bf16.msra.mxu0 0
        %876 = vmatprep.subr.bf16.mxu0 0
        %877 = vmatpush1.bf16.msra.mxu0 0
        %878 = vmatprep.subr.bf16.mxu0 0
        %879 = vmatpush1.bf16.msra.mxu0 0
        %880 = vmatprep.subr.bf16.mxu0 0
        %881 = vmatpush1.bf16.msra.mxu0 0
        %882 = vmatprep.subr.bf16.mxu0 0
        %883 = vmatpush1.bf16.msra.mxu0 0
        %884 = vmatprep.subr.bf16.mxu0 0
        %885 = vmatpush1.bf16.msra.mxu0 0
        %886 = vmatprep.subr.bf16.mxu0 0
        %887 = vmatpush1.bf16.msra.mxu0 0
        %888 = vmatprep.subr.bf16.mxu0 0
        %889 = vmatpush1.bf16.msra.mxu0 0
        %890 = vmatprep.subr.bf16.mxu0 0
        %891 = vmatpush1.bf16.msra.mxu0 0
        %892 = vmatprep.subr.bf16.mxu0 0
        %893 = vmatpush1.bf16.msra.mxu0 0
        %894 = vmatprep.subr.bf16.mxu0 0
        %895 = vmatpush1.bf16.msra.mxu0 0
        %896 = vmatprep.mubr.bf16.mxu0 0
        %897 = vmatmul.mubr.bf16.gmra.mrb[0].mxu0 %v859
        %v898 = vpop.f32.mrb[0].mxu0
        %v899 = vadd.f32 0.0, %v898
        %v900 = vpop.f32.mrb[0].mxu0
        %v901 = vpop.f32.mrb[0].mxu0
        %v902 = vpop.f32.mrb[0].mxu0
        %903 = vdwg.mxu0
        %v904 = vadd.f32 %v855, %v899
        %905 = vst.msk [vmem:[%s848] sm:$0xff] %vm364, %v904
        %906 = vst.msk [vmem:[%s822] sm:$0xff] %vm434, %v827
        // Predicated region
        $region45: #{causal_self_attention.3} parent=39 // pred_check
          %p907 = pneg %p357
        $region46: #{causal_self_attention.3} parent=39 // pred_check_branch
          %909 = sbr.rel (%p907) target = $region48
        $region47: #{causal_self_attention.3} parent=39 // pred_region
          %v910 = vld [vmem:[#allocation3] sm:$0xff]
          %v911 = vrcp.pop %v910
          %v912 = vld [vmem:[#allocation4] sm:$0xff]
          %914 = vset.pattern.permute.xlu0 0
          %915 = vperm.xlu0 %914, %v911
          %v916 = vpop.permute.xlu0 %915
          %v918 = vmul.f32 %v912, %v916
          %v919 = vpack.c.bf16 %v918, %v918
          %v920 = vld [vmem:[%s5] sm:$0xf]
          %v921 = vld [vmem:[%s570] sm:$0xff]
          %v922 = vrcp.pop %v921
          %v923 = vld [vmem:[%s575] sm:$0xff]
          %925 = vset.pattern.permute.xlu0 0
          %926 = vperm.xlu0 %925, %v922
          %v927 = vpop.permute.xlu0 %926
          %v929 = vmul.f32 %v923, %v927
          %v930 = vpack.c.bf16 %v929, %v929
          %v931 = vld [vmem:[%s5 + $0x4] sm:$0xf]
          %v933 = vsel %vm364, %v930, 0
          %v936 = vsel %vm446, %v931, 0
          %938 = vmatprep.subr.bf16.mxu0 0
          %939 = vmatpush1.bf16.msra.mxu0 %v936
          %940 = vmatprep.subr.bf16.mxu0 0
          %941 = vmatpush1.bf16.msra.mxu0 0
          %942 = vmatprep.subr.bf16.mxu0 0
          %943 = vmatpush1.bf16.msra.mxu0 0
          %944 = vmatprep.subr.bf16.mxu0 0
          %945 = vmatpush1.bf16.msra.mxu0 0
          %946 = vmatprep.subr.bf16.mxu0 0
          %947 = vmatpush1.bf16.msra.mxu0 0
          %948 = vmatprep.subr.bf16.mxu0 0
          %949 = vmatpush1.bf16.msra.mxu0 0
          %950 = vmatprep.subr.bf16.mxu0 0
          %951 = vmatpush1.bf16.msra.mxu0 0
          %952 = vmatprep.subr.bf16.mxu0 0
          %953 = vmatpush1.bf16.msra.mxu0 0
          %954 = vmatprep.subr.bf16.mxu0 0
          %955 = vmatpush1.bf16.msra.mxu0 0
          %956 = vmatprep.subr.bf16.mxu0 0
          %957 = vmatpush1.bf16.msra.mxu0 0
          %958 = vmatprep.subr.bf16.mxu0 0
          %959 = vmatpush1.bf16.msra.mxu0 0
          %960 = vmatprep.subr.bf16.mxu0 0
          %961 = vmatpush1.bf16.msra.mxu0 0
          %962 = vmatprep.subr.bf16.mxu0 0
          %963 = vmatpush1.bf16.msra.mxu0 0
          %964 = vmatprep.subr.bf16.mxu0 0
          %965 = vmatpush1.bf16.msra.mxu0 0
          %966 = vmatprep.subr.bf16.mxu0 0
          %967 = vmatpush1.bf16.msra.mxu0 0
          %968 = vmatprep.subr.bf16.mxu0 0
          %969 = vmatpush1.bf16.msra.mxu0 0
          %970 = vmatprep.mubr.bf16.mxu0 0
          %971 = vmatmul.mubr.bf16.gmra.mrb[0].mxu0 %v933
          %v972 = vpop.f32.mrb[0].mxu0
          %v973 = vadd.f32 0.0, %v972
          %v974 = vpop.f32.mrb[0].mxu0
          %v975 = vpop.f32.mrb[0].mxu0
          %v976 = vpop.f32.mrb[0].mxu0
          %977 = vdwg.mxu0
          %v979 = vsel %vm364, %v919, 0
          %v982 = vsel %vm446, %v920, 0
          %984 = vmatprep.subr.bf16.mxu0 0
          %985 = vmatpush1.bf16.msra.mxu0 %v982
          %986 = vmatprep.subr.bf16.mxu0 0
          %987 = vmatpush1.bf16.msra.mxu0 0
          %988 = vmatprep.subr.bf16.mxu0 0
          %989 = vmatpush1.bf16.msra.mxu0 0
          %990 = vmatprep.subr.bf16.mxu0 0
          %991 = vmatpush1.bf16.msra.mxu0 0
          %992 = vmatprep.subr.bf16.mxu0 0
          %993 = vmatpush1.bf16.msra.mxu0 0
          %994 = vmatprep.subr.bf16.mxu0 0
          %995 = vmatpush1.bf16.msra.mxu0 0
          %996 = vmatprep.subr.bf16.mxu0 0
          %997 = vmatpush1.bf16.msra.mxu0 0
          %998 = vmatprep.subr.bf16.mxu0 0
          %999 = vmatpush1.bf16.msra.mxu0 0
          %1000 = vmatprep.subr.bf16.mxu0 0
          %1001 = vmatpush1.bf16.msra.mxu0 0
          %1002 = vmatprep.subr.bf16.mxu0 0
          %1003 = vmatpush1.bf16.msra.mxu0 0
          %1004 = vmatprep.subr.bf16.mxu0 0
          %1005 = vmatpush1.bf16.msra.mxu0 0
          %1006 = vmatprep.subr.bf16.mxu0 0
          %1007 = vmatpush1.bf16.msra.mxu0 0
          %1008 = vmatprep.subr.bf16.mxu0 0
          %1009 = vmatpush1.bf16.msra.mxu0 0
          %1010 = vmatprep.subr.bf16.mxu0 0
          %1011 = vmatpush1.bf16.msra.mxu0 0
          %1012 = vmatprep.subr.bf16.mxu0 0
          %1013 = vmatpush1.bf16.msra.mxu0 0
          %1014 = vmatprep.subr.bf16.mxu0 0
          %1015 = vmatpush1.bf16.msra.mxu0 0
          %1016 = vmatprep.mubr.bf16.mxu0 0
          %1017 = vmatmul.mubr.bf16.gmra.mrb[0].mxu0 %v979
          %v1018 = vpop.f32.mrb[0].mxu0
          %v1019 = vadd.f32 %v973, %v1018
          %v1020 = vpop.f32.mrb[0].mxu0
          %v1021 = vpop.f32.mrb[0].mxu0
          %v1022 = vpop.f32.mrb[0].mxu0
          %1023 = vdwg.mxu0
          %v1024 = vld [vmem:[%s708] sm:$0xff]
          %v1025 = vrcp.pop %v1024
          %v1026 = vld [vmem:[%s713] sm:$0xff]
          %1028 = vset.pattern.permute.xlu0 0
          %1029 = vperm.xlu0 %1028, %v1025
          %v1030 = vpop.permute.xlu0 %1029
          %v1032 = vmul.f32 %v1026, %v1030
          %v1033 = vpack.c.bf16 %v1032, %v1032
          %v1034 = vld [vmem:[%s5 + $0x8] sm:$0xf]
          %v1036 = vsel %vm364, %v1033, 0
          %v1039 = vsel %vm446, %v1034, 0
          %1041 = vmatprep.subr.bf16.mxu0 0
          %1042 = vmatpush1.bf16.msra.mxu0 %v1039
          %1043 = vmatprep.subr.bf16.mxu0 0
          %1044 = vmatpush1.bf16.msra.mxu0 0
          %1045 = vmatprep.subr.bf16.mxu0 0
          %1046 = vmatpush1.bf16.msra.mxu0 0
          %1047 = vmatprep.subr.bf16.mxu0 0
          %1048 = vmatpush1.bf16.msra.mxu0 0
          %1049 = vmatprep.subr.bf16.mxu0 0
          %1050 = vmatpush1.bf16.msra.mxu0 0
          %1051 = vmatprep.subr.bf16.mxu0 0
          %1052 = vmatpush1.bf16.msra.mxu0 0
          %1053 = vmatprep.subr.bf16.mxu0 0
          %1054 = vmatpush1.bf16.msra.mxu0 0
          %1055 = vmatprep.subr.bf16.mxu0 0
          %1056 = vmatpush1.bf16.msra.mxu0 0
          %1057 = vmatprep.subr.bf16.mxu0 0
          %1058 = vmatpush1.bf16.msra.mxu0 0
          %1059 = vmatprep.subr.bf16.mxu0 0
          %1060 = vmatpush1.bf16.msra.mxu0 0
          %1061 = vmatprep.subr.bf16.mxu0 0
          %1062 = vmatpush1.bf16.msra.mxu0 0
          %1063 = vmatprep.subr.bf16.mxu0 0
          %1064 = vmatpush1.bf16.msra.mxu0 0
          %1065 = vmatprep.subr.bf16.mxu0 0
          %1066 = vmatpush1.bf16.msra.mxu0 0
          %1067 = vmatprep.subr.bf16.mxu0 0
          %1068 = vmatpush1.bf16.msra.mxu0 0
          %1069 = vmatprep.subr.bf16.mxu0 0
          %1070 = vmatpush1.bf16.msra.mxu0 0
          %1071 = vmatprep.subr.bf16.mxu0 0
          %1072 = vmatpush1.bf16.msra.mxu0 0
          %1073 = vmatprep.mubr.bf16.mxu0 0
          %1074 = vmatmul.mubr.bf16.gmra.mrb[0].mxu0 %v1036
          %v1075 = vpop.f32.mrb[0].mxu0
          %v1076 = vadd.f32 0.0, %v1075
          %v1077 = vpop.f32.mrb[0].mxu0
          %v1078 = vpop.f32.mrb[0].mxu0
          %v1079 = vpop.f32.mrb[0].mxu0
          %1080 = vdwg.mxu0
          %v1081 = vadd.f32 %v1019, %v1076
          %v1082 = vld [vmem:[%s843] sm:$0xff]
          %v1083 = vrcp.pop %v1082
          %v1084 = vld [vmem:[%s848] sm:$0xff]
          %1086 = vset.pattern.permute.xlu0 0
          %1087 = vperm.xlu0 %1086, %v1083
          %v1088 = vpop.permute.xlu0 %1087
          %v1090 = vmul.f32 %v1084, %v1088
          %v1091 = vpack.c.bf16 %v1090, %v1090
          %v1092 = vld [vmem:[%s5 + $0xc] sm:$0xf]
          %v1094 = vsel %vm364, %v1091, 0
          %v1097 = vsel %vm446, %v1092, 0
          %1099 = vmatprep.subr.bf16.mxu0 0
          %1100 = vmatpush1.bf16.msra.mxu0 %v1097
          %1101 = vmatprep.subr.bf16.mxu0 0
          %1102 = vmatpush1.bf16.msra.mxu0 0
          %1103 = vmatprep.subr.bf16.mxu0 0
          %1104 = vmatpush1.bf16.msra.mxu0 0
          %1105 = vmatprep.subr.bf16.mxu0 0
          %1106 = vmatpush1.bf16.msra.mxu0 0
          %1107 = vmatprep.subr.bf16.mxu0 0
          %1108 = vmatpush1.bf16.msra.mxu0 0
          %1109 = vmatprep.subr.bf16.mxu0 0
          %1110 = vmatpush1.bf16.msra.mxu0 0
          %1111 = vmatprep.subr.bf16.mxu0 0
          %1112 = vmatpush1.bf16.msra.mxu0 0
          %1113 = vmatprep.subr.bf16.mxu0 0
          %1114 = vmatpush1.bf16.msra.mxu0 0
          %1115 = vmatprep.subr.bf16.mxu0 0
          %1116 = vmatpush1.bf16.msra.mxu0 0
          %1117 = vmatprep.subr.bf16.mxu0 0
          %1118 = vmatpush1.bf16.msra.mxu0 0
          %1119 = vmatprep.subr.bf16.mxu0 0
          %1120 = vmatpush1.bf16.msra.mxu0 0
          %1121 = vmatprep.subr.bf16.mxu0 0
          %1122 = vmatpush1.bf16.msra.mxu0 0
          %1123 = vmatprep.subr.bf16.mxu0 0
          %1124 = vmatpush1.bf16.msra.mxu0 0
          %1125 = vmatprep.subr.bf16.mxu0 0
          %1126 = vmatpush1.bf16.msra.mxu0 0
          %1127 = vmatprep.subr.bf16.mxu0 0
          %1128 = vmatpush1.bf16.msra.mxu0 0
          %1129 = vmatprep.subr.bf16.mxu0 0
          %1130 = vmatpush1.bf16.msra.mxu0 0
          %1131 = vmatprep.mubr.bf16.mxu0 0
          %1132 = vmatmul.mubr.bf16.gmra.mrb[0].mxu0 %v1094
          %v1133 = vpop.f32.mrb[0].mxu0
          %v1134 = vadd.f32 0.0, %v1133
          %v1135 = vpop.f32.mrb[0].mxu0
          %v1136 = vpop.f32.mrb[0].mxu0
          %v1137 = vpop.f32.mrb[0].mxu0
          %1138 = vdwg.mxu0
          %v1139 = vadd.f32 %v1081, %v1134
          %v1140 = vld [vmem:[%s6] sm:$0x1]
          %v1142 = vlaneseq
          %v1143 = vshrl.u32 %v1142, 7
          %v1144 = vsub.s32 0, %v1143
          %v1145 = vrot.slane %v1140, %v1144
          %v1147 = vadd.f32 %v1139, %v1145
          %vm1148 = vcmask 261120
          %1149 = vst.msk [vmem:[%s300] sm:$0xff] %vm1148, %v1147
        $region48: #{causal_self_attention.3} parent=39 // pred_fallthru
          _
        %s1150 = sand.u32 %s179, 1
        %s1151 = scalar_lea.sflag [#allocation9], %s1150
        %s1152 = sand.u32 %s179, 1
        %s1153 = smul.addr %s1152, 8
        %s1154 = scalar_lea.vmem [#allocation8], %s1153
        // Predicated region
        $region49: #{causal_self_attention.3} parent=39 // pred_check
          %p1155 = pneg %p189
        $region50: #{causal_self_attention.3} parent=39 // pred_check_branch
          %1157 = sbr.rel (%p1155) target = $region52
        $region51: #{causal_self_attention.3} parent=39 // pred_region
          %s1158 = sld [smem:[#allocation6 + %s28]]
          %s1160 = ssub.s32 128, 128
          %1161 = vsyncadd %s1151, %s1160
          %s1162 = sadd.s32 %s1158, %s27
          %s1163 = smul.addr %s1162, 128
          %s1164 = scalar_lea.hbm %s7, %s1163
          %s1166 = sshll.u32 %s1154, 4
          %s1167 = int_to_ptr.vmem [resolvable:$true] %s1166
          %1169 = dma.vmem_to_hbm [thread:$0]  %s1167, 128, %s1164, %s1151
        $region52: #{causal_self_attention.3} parent=39 // pred_fallthru
          _
      $region40: #{causal_self_attention.3} parent=5 // pred_fallthru
        _
      %p1170 = scmp.le.s32.totalorder 2, %s18
      // Predicated region
      $region53: #{causal_self_attention.3} parent=5 // pred_check
        %p1171 = pneg %p1170
      $region54: #{causal_self_attention.3} parent=5 // pred_check_branch
        %1173 = sbr.rel (%p1171) target = $region56
      $region55: #{causal_self_attention.3} parent=5 // pred_region
        %s1174 = ssub.s32 %s18, 2
        // Predicated region
        $region57: #{causal_self_attention.3} parent=55 // pred_check
          %p1175 = pneg %p195
        $region58: #{causal_self_attention.3} parent=55 // pred_check_branch
          %1177 = sbr.rel (%p1175) target = $region60
        $region59: #{causal_self_attention.3} parent=55 // pred_region
          %s1178 = sand.u32 %s180, 1
          %s1179 = scalar_lea.sflag [#allocation9], %s1178
          %s1180 = sand.u32 %s180, 1
          %s1181 = smul.addr %s1180, 8
          %s1182 = scalar_lea.vmem [#allocation8], %s1181
          %1183 = dma.done %s1179, 128
        $region60: #{causal_self_attention.3} parent=55 // pred_fallthru
          _
      $region56: #{causal_self_attention.3} parent=5 // pred_fallthru
        _
    $region6: #{causal_self_attention.3} parent=1 // loop_footer
      %s22 = sadd.s32 1, %s18
    $region7: #{causal_self_attention.3} parent=1 // loop_footer_branch
      %17 = sbr.rel target = $region3
    $region8: #{causal_self_attention.3} parent=1 // loop_exit
      _
    %1184 = vsyncpa [#allocation9], 1
    %s1185 = scalar_lea.sflag [#allocation9], 1
    %1186 = vsyncpa %s1185, 1

</llo_original>
